<compile_context>
chip_gen: v5e
topology: v5e:2x2
jax: 0.10.0
libtpu: 0.0.40
codegen_flags: <defaults>
</compile_context>

<pallas_src>
import jax
import jax.numpy as jnp
from jax.experimental import pallas as pl
from jax.experimental.pallas import tpu as pltpu


# --------------------------------- Pallas kernel ---------------------------------
def vqa_attention_kernel(img_all_ref, img_tile_ref, txt_ref,
                         w_ip_ref, b_ip_ref,      # image_projection   (bf16 W, f32 b)
                         w_qp_ref, b_qp_ref,      # question_projection
                         w_att_ref, b_att_ref,    # attention_scores Linear(H, 1) (f32 row / scalar)
                         w_h_ref, b_h_ref,        # hidden[0]
                         w_out_ref, b_out_ref,    # lin2 (padded to 128 lanes)
                         out_ref):
    # bf16 MXU operands, f32 accumulation.
    img_all = img_all_ref[...].astype(jnp.bfloat16)    # (B,  D_img)  all image rows (keys)
    img_til = img_tile_ref[...].astype(jnp.bfloat16)   # (TQ, D_img)  this tile's rows
    txt     = txt_ref[...].astype(jnp.bfloat16)        # (TQ, D_txt)

    p_img_all = jnp.dot(img_all, w_ip_ref[...],
                        preferred_element_type=jnp.float32) + b_ip_ref[...]    # (B,  H)
    p_img_t   = jnp.dot(img_til, w_ip_ref[...],
                        preferred_element_type=jnp.float32) + b_ip_ref[...]    # (TQ, H)
    p_q       = jnp.dot(txt, w_qp_ref[...],
                        preferred_element_type=jnp.float32) + b_qp_ref[...]    # (TQ, H)

    # --- MultimodalAttention scores: s[i,j] = w_att . tanh(p_img[j] + p_q[i]) + b ---
    # f32 tanh/exp kept for v5e portability (bf16 EUP path is a v6e/v7x-only win).
    t = jnp.tanh(p_img_all[None, :, :] + p_q[:, None, :])                      # (TQ, B, H)
    s = jnp.sum(t * w_att_ref[...], axis=-1) + b_att_ref[...]                  # (TQ, B)

    # softmax over the image axis (torch dim=1)
    m = jnp.max(s, axis=1, keepdims=True)
    e = jnp.exp(s - m)
    inv = pl.reciprocal(jnp.sum(e, axis=1, keepdims=True), approx=True)        # EUP slot
    a = e * inv                                                                # (TQ, B)

    # torch: (a.unsqueeze(-1) * projected_images.unsqueeze(1)).sum(dim=1)
    #   == p_img[i, h] * sum_j a[i, j]   (p_img indexed by the question row i)
    row_sum = jnp.sum(a, axis=1, keepdims=True)                                # (TQ, 1) ~= 1
    attended = p_img_t * row_sum
    combined = attended + p_q                                                  # (TQ, H)

    # --- classification head ---
    # TODO(synk): dropout omitted (inference semantics); training-mode dropout not modeled.
    h = jnp.dot(combined.astype(jnp.bfloat16), w_h_ref[...],
                preferred_element_type=jnp.float32) + b_h_ref[...]
    h = jnp.maximum(h, 0.0)                                                    # ReLU
    logits = jnp.dot(h.astype(jnp.bfloat16), w_out_ref[...],
                     preferred_element_type=jnp.float32) + b_out_ref[...]      # (TQ, OUT_PAD)
    out_ref[...] = logits.astype(out_ref.dtype)


# --------------------------------- wrapper ---------------------------------------
def vqa_attention_forward(img_feat, txt_feat, p, *, target_size, tq=8):
    B, d_img = img_feat.shape
    _, d_txt = txt_feat.shape
    H = p["w_ip"].shape[1]
    out_pad = p["w_out"].shape[1]
    assert B % tq == 0, "batch must be a multiple of the query tile"

    full = lambda i: (0, 0)   # resident block (weights / full image batch)
    row  = lambda i: (i, 0)   # tiled along query rows

    grid_spec = pltpu.PrefetchScalarGridSpec(
        num_scalar_prefetch=0,
        grid=(B // tq,),
        in_specs=[
            pl.BlockSpec((B, d_img), full),       # img_feat (all rows, attention keys)
            pl.BlockSpec((tq, d_img), row),       # img_feat (this tile's rows)
            pl.BlockSpec((tq, d_txt), row),       # txt_feat tile
            pl.BlockSpec((d_img, H), full), pl.BlockSpec((1, H), full),   # image_projection
            pl.BlockSpec((d_txt, H), full), pl.BlockSpec((1, H), full),   # question_projection
            pl.BlockSpec((1, H), full),     pl.BlockSpec((1, 1), full),   # attention_scores
            pl.BlockSpec((H, H), full),     pl.BlockSpec((1, H), full),   # hidden[0]
            pl.BlockSpec((H, out_pad), full), pl.BlockSpec((1, out_pad), full),  # lin2 (padded)
        ],
        out_specs=pl.BlockSpec((tq, out_pad), row),
    )

    out_padded = pl.pallas_call(
        vqa_attention_kernel,
        out_shape=jax.ShapeDtypeStruct((B, out_pad), jnp.float32),
        grid_spec=grid_spec,
        compiler_params=pltpu.CompilerParams(
            dimension_semantics=("parallel",),          # megacore-shard query tiles (v7x)
            vmem_limit_bytes=32 * 1024 * 1024,          # explicit; usage here is ~1 MiB
        ),
    )(img_feat, img_feat, txt_feat,
      p["w_ip"], p["b_ip"], p["w_qp"], p["b_qp"],
      p["w_att"], p["b_att"], p["w_h"], p["b_h"],
      p["w_out"], p["b_out"])

    return out_padded[:, :target_size]                  # drop lane padding


# ------------------ deterministic parameter init (PyTorch nn.Linear-style) -------
def init_linear(key, in_dim, out_dim):
    k1, k2 = jax.random.split(key)
    bound = 1.0 / jnp.sqrt(jnp.float32(in_dim))
    w = jax.random.uniform(k1, (in_dim, out_dim), jnp.float32, -bound, bound)  # stored transposed
    b = jax.random.uniform(k2, (1, out_dim), jnp.float32, -bound, bound)
    return w, b


def make_params(key, d_img, d_txt, hidden, target, out_pad):
    ks = jax.random.split(key, 5)
    w_ip, b_ip = init_linear(ks[0], d_img, hidden)        # image_projection
    w_qp, b_qp = init_linear(ks[1], d_txt, hidden)        # question_projection
    w_att, b_att = init_linear(ks[2], hidden, 1)          # attention_scores
    w_h, b_h = init_linear(ks[3], hidden, hidden)         # hidden[0]
    w_out, b_out = init_linear(ks[4], hidden, target)     # lin2

    raw = dict(w_ip=w_ip, b_ip=b_ip, w_qp=w_qp, b_qp=b_qp,
               w_att=w_att.T, b_att=b_att, w_h=w_h, b_h=b_h,
               w_out=w_out, b_out=b_out)

    # lane-dense padded lin2 (zero columns beyond target), bf16 MXU weights
    w_out_pad = jnp.zeros((hidden, out_pad), jnp.float32).at[:, :target].set(w_out)
    b_out_pad = jnp.zeros((1, out_pad), jnp.float32).at[:, :target].set(b_out[0])

    kern = dict(
        w_ip=w_ip.astype(jnp.bfloat16), b_ip=b_ip,
        w_qp=w_qp.astype(jnp.bfloat16), b_qp=b_qp,
        w_att=w_att.T, b_att=b_att,                       # f32 (VPU broadcast path)
        w_h=w_h.astype(jnp.bfloat16), b_h=b_h,
        w_out=w_out_pad.astype(jnp.bfloat16), b_out=b_out_pad,
    )
    return raw, kern


# -------------- stand-in encoders (external pre-trained modules; plain-JAX glue) --
def image_encoder(image, w_enc):       # image: (B, 3, Hs, Ws) NCHW
    B = image.shape[0]
    return image.reshape(B, -1) @ w_enc            # (B, d_img)


def text_encoder(text, mask, emb):     # text: (B, S) int32 token ids, mask unused in stand-in
    return jnp.mean(emb[text], axis=1)             # (B, d_txt)


# ------------------ pure-JAX reference (mirrors the kernel's bf16 MXU numerics) ---
def reference(img_feat, txt_feat, raw):
    bf = jnp.bfloat16
    f32 = jnp.float32
    p_img = jnp.dot(img_feat.astype(bf), raw["w_ip"].astype(bf),
                    preferred_element_type=f32) + raw["b_ip"]
    p_q = jnp.dot(txt_feat.astype(bf), raw["w_qp"].astype(bf),
                  preferred_element_type=f32) + raw["b_qp"]
    t = jnp.tanh(p_img[None, :, :] + p_q[:, None, :])
    s = jnp.sum(t * raw["w_att"], axis=-1) + raw["b_att"]
    a = jax.nn.softmax(s, axis=1)
    attended = jnp.sum(a[:, :, None] * p_img[:, None, :], axis=1)   # literal torch broadcast
    combined = attended + p_q
    h = jnp.maximum(jnp.dot(combined.astype(bf), raw["w_h"].astype(bf),
                            preferred_element_type=f32) + raw["b_h"], 0.0)
    return jnp.dot(h.astype(bf), raw["w_out"].astype(bf),
                   preferred_element_type=f32) + raw["b_out"]


if __name__ == "__main__":
    # Small, (8,128)-aligned shapes consistent with the module's forward.
    B = 16                     # batch (multiple of 8/16 sublanes)
    TQ = 8                     # query-row tile -> grid of 2 (parallel)
    img_hw = 16
    seq_len = 8
    vocab = 32
    d_img = 128                # image-encoder output dim (lane-aligned)
    d_txt = 128                # text-encoder output dim (lane-aligned)
    hidden = 128               # hidden_size
    target = 16                # target_size (padded to 128 lanes inside the kernel)
    out_pad = 128
    # n_layers = 1 (module default) -> one hidden Linear

    key = jax.random.PRNGKey(0)
    k_enc, k_emb, k_par, k_img, k_txt = jax.random.split(key, 5)

    # stand-in encoder params
    w_enc_img = jax.random.normal(k_enc, (3 * img_hw * img_hw, d_img), jnp.float32) * 0.02
    emb_txt = jax.random.normal(k_emb, (vocab, d_txt), jnp.float32) * 0.02

    raw_params, kern_params = make_params(k_par, d_img, d_txt, hidden, target, out_pad)

    # inputs
    image = jax.random.normal(k_img, (B, 3, img_hw, img_hw), jnp.float32)
    text = jax.random.randint(k_txt, (B, seq_len), 0, vocab, jnp.int32)

    # forward (encoders in plain JAX; attention + head in the Pallas kernel)
    img_feat = image_encoder(image, w_enc_img)
    txt_feat = text_encoder(text, None, emb_txt)

    out = vqa_attention_forward(img_feat, txt_feat, kern_params, target_size=target, tq=TQ)
    out = jax.block_until_ready(out)

    ref = reference(img_feat, txt_feat, raw_params)
    assert out.shape == (B, target)
    assert jnp.allclose(out, ref, rtol=2e-2, atol=2e-2), "Pallas kernel mismatch vs JAX reference"

    print("KERNEL_OK")
</pallas_src>

<mosaic_0001>
module attributes {stable_mosaic.version = 11 : i64} {
  func.func @vqa_attention_kernel(%arg0: i32, %arg1: memref<16x128xf32, #tpu.memory_space<vmem>>, %arg2: memref<8x128xf32, #tpu.memory_space<vmem>>, %arg3: memref<8x128xf32, #tpu.memory_space<vmem>>, %arg4: memref<128x128xbf16, #tpu.memory_space<vmem>>, %arg5: memref<1x128xf32, #tpu.memory_space<vmem>>, %arg6: memref<128x128xbf16, #tpu.memory_space<vmem>>, %arg7: memref<1x128xf32, #tpu.memory_space<vmem>>, %arg8: memref<1x128xf32, #tpu.memory_space<vmem>>, %arg9: memref<1x1xf32, #tpu.memory_space<vmem>>, %arg10: memref<128x128xbf16, #tpu.memory_space<vmem>>, %arg11: memref<1x128xf32, #tpu.memory_space<vmem>>, %arg12: memref<128x128xbf16, #tpu.memory_space<vmem>>, %arg13: memref<1x128xf32, #tpu.memory_space<vmem>>, %arg14: memref<8x128xf32, #tpu.memory_space<vmem>>) attributes {dimension_semantics = [#tpu.dimension_semantics<parallel>], iteration_bounds = array<i64: 2>, scalar_prefetch = 0 : i64, scratch_operands = 0 : i64, tpu.core_type = #tpu.core_type<tc>, window_params = [{pipeline_mode = #tpu.pipeline_mode<synchronous>, transform_indices = @transform_0, window_bounds = array<i64: 16, 128>}, {transform_indices = @transform_1, window_bounds = array<i64: 8, 128>}, {transform_indices = @transform_2, window_bounds = array<i64: 8, 128>}, {pipeline_mode = #tpu.pipeline_mode<synchronous>, transform_indices = @transform_3, window_bounds = array<i64: 128, 128>}, {pipeline_mode = #tpu.pipeline_mode<synchronous>, transform_indices = @transform_4, window_bounds = array<i64: 1, 128>}, {pipeline_mode = #tpu.pipeline_mode<synchronous>, transform_indices = @transform_5, window_bounds = array<i64: 128, 128>}, {pipeline_mode = #tpu.pipeline_mode<synchronous>, transform_indices = @transform_6, window_bounds = array<i64: 1, 128>}, {pipeline_mode = #tpu.pipeline_mode<synchronous>, transform_indices = @transform_7, window_bounds = array<i64: 1, 128>}, {pipeline_mode = #tpu.pipeline_mode<synchronous>, transform_indices = @transform_8, window_bounds = array<i64: 1, 1>}, {pipeline_mode = #tpu.pipeline_mode<synchronous>, transform_indices = @transform_9, window_bounds = array<i64: 128, 128>}, {pipeline_mode = #tpu.pipeline_mode<synchronous>, transform_indices = @transform_10, window_bounds = array<i64: 1, 128>}, {pipeline_mode = #tpu.pipeline_mode<synchronous>, transform_indices = @transform_11, window_bounds = array<i64: 128, 128>}, {pipeline_mode = #tpu.pipeline_mode<synchronous>, transform_indices = @transform_12, window_bounds = array<i64: 1, 128>}, {transform_indices = @transform_13, window_bounds = array<i64: 8, 128>}]} {
    %c0 = arith.constant 0 : index
    %c0_0 = arith.constant 0 : index
    %0 = vector.load %arg1[%c0, %c0_0] : memref<16x128xf32, #tpu.memory_space<vmem>>, vector<16x128xf32>
    %1 = arith.truncf %0 : vector<16x128xf32> to vector<16x128xbf16>
    %c0_1 = arith.constant 0 : index
    %c0_2 = arith.constant 0 : index
    %2 = vector.load %arg2[%c0_1, %c0_2] : memref<8x128xf32, #tpu.memory_space<vmem>>, vector<8x128xf32>
    %3 = arith.truncf %2 : vector<8x128xf32> to vector<8x128xbf16>
    %c0_3 = arith.constant 0 : index
    %c0_4 = arith.constant 0 : index
    %4 = vector.load %arg3[%c0_3, %c0_4] : memref<8x128xf32, #tpu.memory_space<vmem>>, vector<8x128xf32>
    %5 = arith.truncf %4 : vector<8x128xf32> to vector<8x128xbf16>
    %c0_5 = arith.constant 0 : index
    %c0_6 = arith.constant 0 : index
    %6 = vector.load %arg4[%c0_5, %c0_6] : memref<128x128xbf16, #tpu.memory_space<vmem>>, vector<128x128xbf16>
    %cst = arith.constant dense<0.000000e+00> : vector<16x128xf32>
    %7 = tpu.matmul %1, %6, %cst {dimension_numbers = #tpu.dot_dimension_numbers<[1], [0], [0], [1], [0, 0, 1, 1], [], []>} : vector<16x128xbf16>, vector<128x128xbf16>, vector<16x128xf32> -> vector<16x128xf32>
    %c0_7 = arith.constant 0 : index
    %c0_8 = arith.constant 0 : index
    %8 = vector.load %arg5[%c0_7, %c0_8] : memref<1x128xf32, #tpu.memory_space<vmem>>, vector<1x128xf32>
    %9 = vector.broadcast %8 : vector<1x128xf32> to vector<16x128xf32>
    %10 = arith.addf %7, %9 : vector<16x128xf32>
    %c0_9 = arith.constant 0 : index
    %c0_10 = arith.constant 0 : index
    %11 = vector.load %arg4[%c0_9, %c0_10] : memref<128x128xbf16, #tpu.memory_space<vmem>>, vector<128x128xbf16>
    %cst_11 = arith.constant dense<0.000000e+00> : vector<8x128xf32>
    %12 = tpu.matmul %3, %11, %cst_11 {dimension_numbers = #tpu.dot_dimension_numbers<[1], [0], [0], [1], [0, 0, 1, 1], [], []>} : vector<8x128xbf16>, vector<128x128xbf16>, vector<8x128xf32> -> vector<8x128xf32>
    %c0_12 = arith.constant 0 : index
    %c0_13 = arith.constant 0 : index
    %13 = vector.load %arg5[%c0_12, %c0_13] : memref<1x128xf32, #tpu.memory_space<vmem>>, vector<1x128xf32>
    %14 = vector.broadcast %13 : vector<1x128xf32> to vector<8x128xf32>
    %15 = arith.addf %12, %14 : vector<8x128xf32>
    %c0_14 = arith.constant 0 : index
    %c0_15 = arith.constant 0 : index
    %16 = vector.load %arg6[%c0_14, %c0_15] : memref<128x128xbf16, #tpu.memory_space<vmem>>, vector<128x128xbf16>
    %cst_16 = arith.constant dense<0.000000e+00> : vector<8x128xf32>
    %17 = tpu.matmul %5, %16, %cst_16 {dimension_numbers = #tpu.dot_dimension_numbers<[1], [0], [0], [1], [0, 0, 1, 1], [], []>} : vector<8x128xbf16>, vector<128x128xbf16>, vector<8x128xf32> -> vector<8x128xf32>
    %c0_17 = arith.constant 0 : index
    %c0_18 = arith.constant 0 : index
    %18 = vector.load %arg7[%c0_17, %c0_18] : memref<1x128xf32, #tpu.memory_space<vmem>>, vector<1x128xf32>
    %19 = vector.broadcast %18 : vector<1x128xf32> to vector<8x128xf32>
    %20 = arith.addf %17, %19 : vector<8x128xf32>
    %21 = vector.shape_cast %10 : vector<16x128xf32> to vector<1x16x128xf32>
    %22 = vector.shape_cast %20 : vector<8x128xf32> to vector<8x1x128xf32>
    %23 = vector.broadcast %21 : vector<1x16x128xf32> to vector<8x16x128xf32>
    %24 = vector.broadcast %22 : vector<8x1x128xf32> to vector<8x16x128xf32>
    %25 = arith.addf %23, %24 : vector<8x16x128xf32>
    %26 = math.tanh %25 : vector<8x16x128xf32>
    %c0_19 = arith.constant 0 : index
    %c0_20 = arith.constant 0 : index
    %27 = vector.load %arg8[%c0_19, %c0_20] : memref<1x128xf32, #tpu.memory_space<vmem>>, vector<1x128xf32>
    %28 = vector.shape_cast %27 : vector<1x128xf32> to vector<1x1x128xf32>
    %29 = vector.broadcast %28 : vector<1x1x128xf32> to vector<8x16x128xf32>
    %30 = arith.mulf %26, %29 : vector<8x16x128xf32>
    %cst_21 = arith.constant dense<0.000000e+00> : vector<8x16xf32>
    %31 = vector.multi_reduction <add>, %30, %cst_21 [2] : vector<8x16x128xf32> to vector<8x16xf32>
    %c0_22 = arith.constant 0 : index
    %c0_23 = arith.constant 0 : index
    %32 = vector.load %arg9[%c0_22, %c0_23] : memref<1x1xf32, #tpu.memory_space<vmem>>, vector<1x1xf32>
    %33 = vector.broadcast %32 : vector<1x1xf32> to vector<8x16xf32>
    %34 = arith.addf %31, %33 : vector<8x16xf32>
    %cst_24 = arith.constant dense<0xFF800000> : vector<8xf32>
    %35 = vector.multi_reduction <maximumf>, %34, %cst_24 [1] : vector<8x16xf32> to vector<8xf32>
    %36 = vector.shape_cast %35 : vector<8xf32> to vector<8x1xf32>
    %37 = vector.broadcast %36 : vector<8x1xf32> to vector<8x16xf32>
    %38 = arith.subf %34, %37 : vector<8x16xf32>
    %39 = math.exp %38 : vector<8x16xf32>
    %cst_25 = arith.constant dense<0.000000e+00> : vector<8xf32>
    %40 = vector.multi_reduction <add>, %39, %cst_25 [1] : vector<8x16xf32> to vector<8xf32>
    %41 = vector.shape_cast %40 : vector<8xf32> to vector<8x1xf32>
    %42 = tpu.reciprocal %41 {approx = true} : vector<8x1xf32> -> vector<8x1xf32>
    %43 = vector.broadcast %42 : vector<8x1xf32> to vector<8x16xf32>
    %44 = arith.mulf %39, %43 : vector<8x16xf32>
    %cst_26 = arith.constant dense<0.000000e+00> : vector<8xf32>
    %45 = vector.multi_reduction <add>, %44, %cst_26 [1] : vector<8x16xf32> to vector<8xf32>
    %46 = vector.shape_cast %45 : vector<8xf32> to vector<8x1xf32>
    %47 = vector.broadcast %46 : vector<8x1xf32> to vector<8x128xf32>
    %48 = arith.mulf %15, %47 : vector<8x128xf32>
    %49 = arith.addf %48, %20 : vector<8x128xf32>
    %50 = arith.truncf %49 : vector<8x128xf32> to vector<8x128xbf16>
    %c0_27 = arith.constant 0 : index
    %c0_28 = arith.constant 0 : index
    %51 = vector.load %arg10[%c0_27, %c0_28] : memref<128x128xbf16, #tpu.memory_space<vmem>>, vector<128x128xbf16>
    %cst_29 = arith.constant dense<0.000000e+00> : vector<8x128xf32>
    %52 = tpu.matmul %50, %51, %cst_29 {dimension_numbers = #tpu.dot_dimension_numbers<[1], [0], [0], [1], [0, 0, 1, 1], [], []>} : vector<8x128xbf16>, vector<128x128xbf16>, vector<8x128xf32> -> vector<8x128xf32>
    %c0_30 = arith.constant 0 : index
    %c0_31 = arith.constant 0 : index
    %53 = vector.load %arg11[%c0_30, %c0_31] : memref<1x128xf32, #tpu.memory_space<vmem>>, vector<1x128xf32>
    %54 = vector.broadcast %53 : vector<1x128xf32> to vector<8x128xf32>
    %55 = arith.addf %52, %54 : vector<8x128xf32>
    %cst_32 = arith.constant 0.000000e+00 : f32
    %56 = vector.broadcast %cst_32 : f32 to vector<8x128xf32>
    %57 = arith.maximumf %55, %56 : vector<8x128xf32>
    %58 = arith.truncf %57 : vector<8x128xf32> to vector<8x128xbf16>
    %c0_33 = arith.constant 0 : index
    %c0_34 = arith.constant 0 : index
    %59 = vector.load %arg12[%c0_33, %c0_34] : memref<128x128xbf16, #tpu.memory_space<vmem>>, vector<128x128xbf16>
    %cst_35 = arith.constant dense<0.000000e+00> : vector<8x128xf32>
    %60 = tpu.matmul %58, %59, %cst_35 {dimension_numbers = #tpu.dot_dimension_numbers<[1], [0], [0], [1], [0, 0, 1, 1], [], []>} : vector<8x128xbf16>, vector<128x128xbf16>, vector<8x128xf32> -> vector<8x128xf32>
    %c0_36 = arith.constant 0 : index
    %c0_37 = arith.constant 0 : index
    %61 = vector.load %arg13[%c0_36, %c0_37] : memref<1x128xf32, #tpu.memory_space<vmem>>, vector<1x128xf32>
    %62 = vector.broadcast %61 : vector<1x128xf32> to vector<8x128xf32>
    %63 = arith.addf %60, %62 : vector<8x128xf32>
    %c0_38 = arith.constant 0 : index
    %c0_39 = arith.constant 0 : index
    %64 = vector.load %arg14[%c0_38, %c0_39] : memref<8x128xf32, #tpu.memory_space<vmem>>, vector<8x128xf32>
    tpu.vector_store %arg14[%c0_38, %c0_39], %63 {strides = array<i32>} : memref<8x128xf32, #tpu.memory_space<vmem>>, vector<8x128xf32>,
    return
  }
  func.func @transform_0(%arg0: i32) -> (i32, i32) {
    %c0_i32 = arith.constant 0 : i32
    %c0_i32_0 = arith.constant 0 : i32
    %c0_i32_1 = arith.constant 0 : i32
    return %c0_i32, %c0_i32_0 : i32, i32
  }
  func.func @transform_1(%arg0: i32) -> (i32, i32) {
    %c0_i32 = arith.constant 0 : i32
    %c0_i32_0 = arith.constant 0 : i32
    return %arg0, %c0_i32 : i32, i32
  }
  func.func @transform_2(%arg0: i32) -> (i32, i32) {
    %c0_i32 = arith.constant 0 : i32
    %c0_i32_0 = arith.constant 0 : i32
    return %arg0, %c0_i32 : i32, i32
  }
  func.func @transform_3(%arg0: i32) -> (i32, i32) {
    %c0_i32 = arith.constant 0 : i32
    %c0_i32_0 = arith.constant 0 : i32
    %c0_i32_1 = arith.constant 0 : i32
    return %c0_i32, %c0_i32_0 : i32, i32
  }
  func.func @transform_4(%arg0: i32) -> (i32, i32) {
    %c0_i32 = arith.constant 0 : i32
    %c0_i32_0 = arith.constant 0 : i32
    %c0_i32_1 = arith.constant 0 : i32
    return %c0_i32, %c0_i32_0 : i32, i32
  }
  func.func @transform_5(%arg0: i32) -> (i32, i32) {
    %c0_i32 = arith.constant 0 : i32
    %c0_i32_0 = arith.constant 0 : i32
    %c0_i32_1 = arith.constant 0 : i32
    return %c0_i32, %c0_i32_0 : i32, i32
  }
  func.func @transform_6(%arg0: i32) -> (i32, i32) {
    %c0_i32 = arith.constant 0 : i32
    %c0_i32_0 = arith.constant 0 : i32
    %c0_i32_1 = arith.constant 0 : i32
    return %c0_i32, %c0_i32_0 : i32, i32
  }
  func.func @transform_7(%arg0: i32) -> (i32, i32) {
    %c0_i32 = arith.constant 0 : i32
    %c0_i32_0 = arith.constant 0 : i32
    %c0_i32_1 = arith.constant 0 : i32
    return %c0_i32, %c0_i32_0 : i32, i32
  }
  func.func @transform_8(%arg0: i32) -> (i32, i32) {
    %c0_i32 = arith.constant 0 : i32
    %c0_i32_0 = arith.constant 0 : i32
    %c0_i32_1 = arith.constant 0 : i32
    return %c0_i32, %c0_i32_0 : i32, i32
  }
  func.func @transform_9(%arg0: i32) -> (i32, i32) {
    %c0_i32 = arith.constant 0 : i32
    %c0_i32_0 = arith.constant 0 : i32
    %c0_i32_1 = arith.constant 0 : i32
    return %c0_i32, %c0_i32_0 : i32, i32
  }
  func.func @transform_10(%arg0: i32) -> (i32, i32) {
    %c0_i32 = arith.constant 0 : i32
    %c0_i32_0 = arith.constant 0 : i32
    %c0_i32_1 = arith.constant 0 : i32
    return %c0_i32, %c0_i32_0 : i32, i32
  }
  func.func @transform_11(%arg0: i32) -> (i32, i32) {
    %c0_i32 = arith.constant 0 : i32
    %c0_i32_0 = arith.constant 0 : i32
    %c0_i32_1 = arith.constant 0 : i32
    return %c0_i32, %c0_i32_0 : i32, i32
  }
  func.func @transform_12(%arg0: i32) -> (i32, i32) {
    %c0_i32 = arith.constant 0 : i32
    %c0_i32_0 = arith.constant 0 : i32
    %c0_i32_1 = arith.constant 0 : i32
    return %c0_i32, %c0_i32_0 : i32, i32
  }
  func.func @transform_13(%arg0: i32) -> (i32, i32) {
    %c0_i32 = arith.constant 0 : i32
    %c0_i32_0 = arith.constant 0 : i32
    return %arg0, %c0_i32 : i32, i32
  }
}

</mosaic_0001>

<llo_original>
// kernel: tpu_custom_call.1
$region0: #{tpu_custom_call.1}
  #allocation0 [shape = 'u32[]', space=smem, size = 0x4, offset = 0x4, fixed_abs, tag = 'smem constant byte address 0x4 - core index']
  #allocation1 [shape = 'u32[72,128]{1,0:T(1,128)}', space=vmem, size = 0x9000, scoped, tag = 'internal scratch']
  #allocation2 [shape = 'f32[1,1]{1,0:T(1,128)S(1)}', space=vmem, size = 0x200, scoped, tag = 'scoped memory for tpu_custom_call.1']
  %s0 = inlined_call_operand.hbm [shape: f32[16,128], index: 0, kind: input, shape index: {}]
  %s1 = inlined_call_operand.hbm [shape: f32[16,128], index: 1, kind: input, shape index: {}]
  %s2 = inlined_call_operand.hbm [shape: f32[16,128], index: 2, kind: input, shape index: {}]
  %s3 = inlined_call_operand.hbm [shape: bf16[128,128], index: 3, kind: input, shape index: {}]
  %s4 = inlined_call_operand.vmem [shape: f32[1,128], index: 4, kind: input, shape index: {}]
  %s5 = inlined_call_operand.hbm [shape: bf16[128,128], index: 5, kind: input, shape index: {}]
  %s6 = inlined_call_operand.vmem [shape: f32[1,128], index: 6, kind: input, shape index: {}]
  %s7 = inlined_call_operand.vmem [shape: f32[1,128], index: 7, kind: input, shape index: {}]
  %s8 = inlined_call_operand.<no memory space> [shape: f32[1,1], index: 8, kind: input, shape index: {}]
  %s9 = inlined_call_operand.hbm [shape: bf16[128,128], index: 9, kind: input, shape index: {}]
  %s10 = inlined_call_operand.vmem [shape: f32[1,128], index: 10, kind: input, shape index: {}]
  %s11 = inlined_call_operand.hbm [shape: bf16[128,128], index: 11, kind: input, shape index: {}]
  %s12 = inlined_call_operand.vmem [shape: f32[1,128], index: 12, kind: input, shape index: {}]
  %s13 = inlined_call_operand.hbm [shape: f32[16,128], index: 13, kind: output, shape index: {}]
  %s14 = sld [smem:[#allocation0]]
  $region113: #{tpu_custom_call.1} parent=0
    _
  %s16 = ssub.s32 1, %s14
  %s17 = scalar_select 0, %s16, %s14
  %v18 = vstv %s8
  %19 = vst [vmem:[#allocation2] sm:$0x1] %v18
  $region1: #{tpu_custom_call.1} parent=0
    #allocation3 [shape = 'u8[8192]{0}', space=vmem, size = 0x2000, scoped, tag = 'input window, operand 0, single buffered']
    #allocation4 [shape = 's32[2]{0}', space=sflag, size = 0x8, scoped, tag = 'scoped memory for tpu_custom_call.1']
    #allocation5 [shape = 's32[2]{0}', space=sflag, size = 0x8, scoped, tag = 'scoped memory for tpu_custom_call.1']
    #allocation6 [shape = 'u8[8192]{0}', space=vmem, size = 0x2000, scoped, tag = 'input window, operand 1']
    #allocation7 [shape = 's32[2]{0}', space=sflag, size = 0x8, scoped, tag = 'scoped memory for tpu_custom_call.1']
    #allocation8 [shape = 'u8[8192]{0}', space=vmem, size = 0x2000, scoped, tag = 'input window, operand 2']
    #allocation9 [shape = 'u8[32768]{0}', space=vmem, size = 0x8000, scoped, tag = 'input window, operand 3, single buffered']
    #allocation10 [shape = 's32[1]{0}', space=sflag, size = 0x4, scoped, tag = 'scoped memory for tpu_custom_call.1']
    #allocation11 [shape = 'u8[32768]{0}', space=vmem, size = 0x8000, scoped, tag = 'input window, operand 5, single buffered']
    #allocation12 [shape = 'u8[32768]{0}', space=vmem, size = 0x8000, scoped, tag = 'input window, operand 9, single buffered']
    #allocation13 [shape = 's32[1]{0}', space=sflag, size = 0x4, scoped, tag = 'scoped memory for tpu_custom_call.1']
    #allocation14 [shape = 'u8[32768]{0}', space=vmem, size = 0x8000, scoped, tag = 'input window, operand 11, single buffered']
    #allocation15 [shape = 'u8[8192]{0}', space=vmem, size = 0x2000, scoped, tag = 'output window, operand 0']
    %20 = vsyncpa [#allocation4], 0
    %21 = vsyncpa [#allocation7], 0
    %s22 = scalar_lea.sflag [#allocation7], 1
    %23 = vsyncpa %s22, 0
    %24 = vsyncpa [#allocation10], 0
    %25 = vsyncpa [#allocation13], 0
    %26 = vsyncpa [#allocation5], 0
    %s27 = scalar_lea.sflag [#allocation5], 1
    %28 = vsyncpa %s27, 0
    loop: start=0, step=1, limit=4
    $region2: #{tpu_custom_call.1} parent=1 // loop_pre_header
      _
    $region3: #{tpu_custom_call.1} parent=1 // loop_header
      %s30 = sphi 0, %s34
      %p31 = scmp.ge.s32.totalorder %s30, 4
      %s38 = sphi 0, %s38
      %s40 = sphi 0, %s38
      %s41 = sphi 0, %s40
      %s55 = sphi 0, %s41
      %s61 = sphi 0, %s63
      %s64 = sphi 0, %s61
      %s65 = sphi 0, %s64
      %s81 = sphi 0, %s65
      %s87 = sphi 0, %s89
      %s90 = sphi 0, %s87
      %s91 = sphi 0, %s90
      %s107 = sphi 0, %s91
      %s111 = sphi 0, %s111
      %s113 = sphi 0, %s111
      %s114 = sphi 0, %s113
      %s128 = sphi 0, %s114
      %s132 = sphi 0, %s132
      %s134 = sphi 0, %s132
      %s135 = sphi 0, %s134
      %s149 = sphi 0, %s135
      %s153 = sphi 0, %s153
      %s155 = sphi 0, %s153
      %s156 = sphi 0, %s155
      %s170 = sphi 0, %s156
      %s174 = sphi 0, %s174
      %s176 = sphi 0, %s174
      %s177 = sphi 0, %s176
      %s191 = sphi 0, %s177
      %s195 = sphi 0, %s195
      %s197 = sphi 0, %s195
      %s198 = sphi 0, %s197
      %s212 = sphi 0, %s198
      %s216 = sphi 0, %s216
      %s218 = sphi 0, %s216
      %s219 = sphi 0, %s218
      %s233 = sphi 0, %s219
      %s237 = sphi 0, %s237
      %s239 = sphi 0, %s237
      %s240 = sphi 0, %s239
      %s254 = sphi 0, %s240
      %s258 = sphi 0, %s258
      %s260 = sphi 0, %s258
      %s261 = sphi 0, %s260
      %s275 = sphi 0, %s261
      %s279 = sphi 0, %s279
      %s281 = sphi 0, %s279
      %s282 = sphi 0, %s281
      %s296 = sphi 0, %s282
      %s300 = sphi 0, %s300
      %s302 = sphi 0, %s300
      %s303 = sphi 0, %s302
      %s317 = sphi 0, %s303
      %s323 = sphi 0, %s325
      %s326 = sphi 0, %s323
      %s327 = sphi 0, %s326
      %s343 = sphi 0, %s327
    $region4: #{tpu_custom_call.1} parent=1 // loop_header_branch
      %33 = sbr.rel (%p31) target = $region8
    $region5: #{tpu_custom_call.1} parent=1 // loop_body
      %s35 = ssub.s32 %s30, 1
      %s36 = ssub.s32 %s30, 2
      %s37 = sadd.s32 %s30, 1
      %s39 = sadd.s32 %s38, 1
      %p42 = scmp.eq.s32.totalorder %s30, 1
      %p43 = scmp.ne.s32.totalorder %s38, %s40
      %p44 = scmp.eq.s32.totalorder %s30, 0
      %p45 = por %p43, %p44
      %p46 = scmp.ne.s32.totalorder %s38, %s40
      %p47 = scmp.eq.s32.totalorder %s35, 1
      %p48 = por %p46, %p47
      %p49 = scmp.ne.s32.totalorder %s40, %s41
      %p50 = scmp.eq.s32.totalorder %s35, 0
      %p51 = por %p49, %p50
      %p52 = scmp.ne.s32.totalorder %s40, %s41
      %p53 = scmp.eq.s32.totalorder %s36, 1
      %p54 = por %p52, %p53
      %p56 = scmp.ne.s32.totalorder %s41, %s55
      %p57 = scmp.eq.s32.totalorder %s36, 0
      %p58 = por %p56, %p57
      %s59 = ssub.s32 %s30, %s37
      %p60 = scmp.eq.s32.totalorder %s59, 0
      %s62 = sadd.s32 %s61, 1
      %s63 = scalar_select %p60, %s61, %s62
      %p66 = pneg %p60
      %p67 = scmp.eq.s32.totalorder %s30, 1
      %p68 = por %p66, %p67
      %p69 = scmp.ne.s32.totalorder %s61, %s64
      %p70 = scmp.eq.s32.totalorder %s30, 0
      %p71 = por %p69, %p70
      %p72 = scmp.ne.s32.totalorder %s61, %s64
      %p73 = scmp.eq.s32.totalorder %s35, 1
      %p74 = por %p72, %p73
      %p75 = scmp.ne.s32.totalorder %s64, %s65
      %p76 = scmp.eq.s32.totalorder %s35, 0
      %p77 = por %p75, %p76
      %p78 = scmp.ne.s32.totalorder %s64, %s65
      %p79 = scmp.eq.s32.totalorder %s36, 1
      %p80 = por %p78, %p79
      %p82 = scmp.ne.s32.totalorder %s65, %s81
      %p83 = scmp.eq.s32.totalorder %s36, 0
      %p84 = por %p82, %p83
      %s85 = ssub.s32 %s30, %s37
      %p86 = scmp.eq.s32.totalorder %s85, 0
      %s88 = sadd.s32 %s87, 1
      %s89 = scalar_select %p86, %s87, %s88
      %p92 = pneg %p86
      %p93 = scmp.eq.s32.totalorder %s30, 1
      %p94 = por %p92, %p93
      %p95 = scmp.ne.s32.totalorder %s87, %s90
      %p96 = scmp.eq.s32.totalorder %s30, 0
      %p97 = por %p95, %p96
      %p98 = scmp.ne.s32.totalorder %s87, %s90
      %p99 = scmp.eq.s32.totalorder %s35, 1
      %p100 = por %p98, %p99
      %p101 = scmp.ne.s32.totalorder %s90, %s91
      %p102 = scmp.eq.s32.totalorder %s35, 0
      %p103 = por %p101, %p102
      %p104 = scmp.ne.s32.totalorder %s90, %s91
      %p105 = scmp.eq.s32.totalorder %s36, 1
      %p106 = por %p104, %p105
      %p108 = scmp.ne.s32.totalorder %s91, %s107
      %p109 = scmp.eq.s32.totalorder %s36, 0
      %p110 = por %p108, %p109
      %s112 = sadd.s32 %s111, 1
      %p115 = scmp.eq.s32.totalorder %s30, 1
      %p116 = scmp.ne.s32.totalorder %s111, %s113
      %p117 = scmp.eq.s32.totalorder %s30, 0
      %p118 = por %p116, %p117
      %p119 = scmp.ne.s32.totalorder %s111, %s113
      %p120 = scmp.eq.s32.totalorder %s35, 1
      %p121 = por %p119, %p120
      %p122 = scmp.ne.s32.totalorder %s113, %s114
      %p123 = scmp.eq.s32.totalorder %s35, 0
      %p124 = por %p122, %p123
      %p125 = scmp.ne.s32.totalorder %s113, %s114
      %p126 = scmp.eq.s32.totalorder %s36, 1
      %p127 = por %p125, %p126
      %p129 = scmp.ne.s32.totalorder %s114, %s128
      %p130 = scmp.eq.s32.totalorder %s36, 0
      %p131 = por %p129, %p130
      %s133 = sadd.s32 %s132, 1
      %p136 = scmp.eq.s32.totalorder %s30, 1
      %p137 = scmp.ne.s32.totalorder %s132, %s134
      %p138 = scmp.eq.s32.totalorder %s30, 0
      %p139 = por %p137, %p138
      %p140 = scmp.ne.s32.totalorder %s132, %s134
      %p141 = scmp.eq.s32.totalorder %s35, 1
      %p142 = por %p140, %p141
      %p143 = scmp.ne.s32.totalorder %s134, %s135
      %p144 = scmp.eq.s32.totalorder %s35, 0
      %p145 = por %p143, %p144
      %p146 = scmp.ne.s32.totalorder %s134, %s135
      %p147 = scmp.eq.s32.totalorder %s36, 1
      %p148 = por %p146, %p147
      %p150 = scmp.ne.s32.totalorder %s135, %s149
      %p151 = scmp.eq.s32.totalorder %s36, 0
      %p152 = por %p150, %p151
      %s154 = sadd.s32 %s153, 1
      %p157 = scmp.eq.s32.totalorder %s30, 1
      %p158 = scmp.ne.s32.totalorder %s153, %s155
      %p159 = scmp.eq.s32.totalorder %s30, 0
      %p160 = por %p158, %p159
      %p161 = scmp.ne.s32.totalorder %s153, %s155
      %p162 = scmp.eq.s32.totalorder %s35, 1
      %p163 = por %p161, %p162
      %p164 = scmp.ne.s32.totalorder %s155, %s156
      %p165 = scmp.eq.s32.totalorder %s35, 0
      %p166 = por %p164, %p165
      %p167 = scmp.ne.s32.totalorder %s155, %s156
      %p168 = scmp.eq.s32.totalorder %s36, 1
      %p169 = por %p167, %p168
      %p171 = scmp.ne.s32.totalorder %s156, %s170
      %p172 = scmp.eq.s32.totalorder %s36, 0
      %p173 = por %p171, %p172
      %s175 = sadd.s32 %s174, 1
      %p178 = scmp.eq.s32.totalorder %s30, 1
      %p179 = scmp.ne.s32.totalorder %s174, %s176
      %p180 = scmp.eq.s32.totalorder %s30, 0
      %p181 = por %p179, %p180
      %p182 = scmp.ne.s32.totalorder %s174, %s176
      %p183 = scmp.eq.s32.totalorder %s35, 1
      %p184 = por %p182, %p183
      %p185 = scmp.ne.s32.totalorder %s176, %s177
      %p186 = scmp.eq.s32.totalorder %s35, 0
      %p187 = por %p185, %p186
      %p188 = scmp.ne.s32.totalorder %s176, %s177
      %p189 = scmp.eq.s32.totalorder %s36, 1
      %p190 = por %p188, %p189
      %p192 = scmp.ne.s32.totalorder %s177, %s191
      %p193 = scmp.eq.s32.totalorder %s36, 0
      %p194 = por %p192, %p193
      %s196 = sadd.s32 %s195, 1
      %p199 = scmp.eq.s32.totalorder %s30, 1
      %p200 = scmp.ne.s32.totalorder %s195, %s197
      %p201 = scmp.eq.s32.totalorder %s30, 0
      %p202 = por %p200, %p201
      %p203 = scmp.ne.s32.totalorder %s195, %s197
      %p204 = scmp.eq.s32.totalorder %s35, 1
      %p205 = por %p203, %p204
      %p206 = scmp.ne.s32.totalorder %s197, %s198
      %p207 = scmp.eq.s32.totalorder %s35, 0
      %p208 = por %p206, %p207
      %p209 = scmp.ne.s32.totalorder %s197, %s198
      %p210 = scmp.eq.s32.totalorder %s36, 1
      %p211 = por %p209, %p210
      %p213 = scmp.ne.s32.totalorder %s198, %s212
      %p214 = scmp.eq.s32.totalorder %s36, 0
      %p215 = por %p213, %p214
      %s217 = sadd.s32 %s216, 1
      %p220 = scmp.eq.s32.totalorder %s30, 1
      %p221 = scmp.ne.s32.totalorder %s216, %s218
      %p222 = scmp.eq.s32.totalorder %s30, 0
      %p223 = por %p221, %p222
      %p224 = scmp.ne.s32.totalorder %s216, %s218
      %p225 = scmp.eq.s32.totalorder %s35, 1
      %p226 = por %p224, %p225
      %p227 = scmp.ne.s32.totalorder %s218, %s219
      %p228 = scmp.eq.s32.totalorder %s35, 0
      %p229 = por %p227, %p228
      %p230 = scmp.ne.s32.totalorder %s218, %s219
      %p231 = scmp.eq.s32.totalorder %s36, 1
      %p232 = por %p230, %p231
      %p234 = scmp.ne.s32.totalorder %s219, %s233
      %p235 = scmp.eq.s32.totalorder %s36, 0
      %p236 = por %p234, %p235
      %s238 = sadd.s32 %s237, 1
      %p241 = scmp.eq.s32.totalorder %s30, 1
      %p242 = scmp.ne.s32.totalorder %s237, %s239
      %p243 = scmp.eq.s32.totalorder %s30, 0
      %p244 = por %p242, %p243
      %p245 = scmp.ne.s32.totalorder %s237, %s239
      %p246 = scmp.eq.s32.totalorder %s35, 1
      %p247 = por %p245, %p246
      %p248 = scmp.ne.s32.totalorder %s239, %s240
      %p249 = scmp.eq.s32.totalorder %s35, 0
      %p250 = por %p248, %p249
      %p251 = scmp.ne.s32.totalorder %s239, %s240
      %p252 = scmp.eq.s32.totalorder %s36, 1
      %p253 = por %p251, %p252
      %p255 = scmp.ne.s32.totalorder %s240, %s254
      %p256 = scmp.eq.s32.totalorder %s36, 0
      %p257 = por %p255, %p256
      %s259 = sadd.s32 %s258, 1
      %p262 = scmp.eq.s32.totalorder %s30, 1
      %p263 = scmp.ne.s32.totalorder %s258, %s260
      %p264 = scmp.eq.s32.totalorder %s30, 0
      %p265 = por %p263, %p264
      %p266 = scmp.ne.s32.totalorder %s258, %s260
      %p267 = scmp.eq.s32.totalorder %s35, 1
      %p268 = por %p266, %p267
      %p269 = scmp.ne.s32.totalorder %s260, %s261
      %p270 = scmp.eq.s32.totalorder %s35, 0
      %p271 = por %p269, %p270
      %p272 = scmp.ne.s32.totalorder %s260, %s261
      %p273 = scmp.eq.s32.totalorder %s36, 1
      %p274 = por %p272, %p273
      %p276 = scmp.ne.s32.totalorder %s261, %s275
      %p277 = scmp.eq.s32.totalorder %s36, 0
      %p278 = por %p276, %p277
      %s280 = sadd.s32 %s279, 1
      %p283 = scmp.eq.s32.totalorder %s30, 1
      %p284 = scmp.ne.s32.totalorder %s279, %s281
      %p285 = scmp.eq.s32.totalorder %s30, 0
      %p286 = por %p284, %p285
      %p287 = scmp.ne.s32.totalorder %s279, %s281
      %p288 = scmp.eq.s32.totalorder %s35, 1
      %p289 = por %p287, %p288
      %p290 = scmp.ne.s32.totalorder %s281, %s282
      %p291 = scmp.eq.s32.totalorder %s35, 0
      %p292 = por %p290, %p291
      %p293 = scmp.ne.s32.totalorder %s281, %s282
      %p294 = scmp.eq.s32.totalorder %s36, 1
      %p295 = por %p293, %p294
      %p297 = scmp.ne.s32.totalorder %s282, %s296
      %p298 = scmp.eq.s32.totalorder %s36, 0
      %p299 = por %p297, %p298
      %s301 = sadd.s32 %s300, 1
      %p304 = scmp.eq.s32.totalorder %s30, 1
      %p305 = scmp.ne.s32.totalorder %s300, %s302
      %p306 = scmp.eq.s32.totalorder %s30, 0
      %p307 = por %p305, %p306
      %p308 = scmp.ne.s32.totalorder %s300, %s302
      %p309 = scmp.eq.s32.totalorder %s35, 1
      %p310 = por %p308, %p309
      %p311 = scmp.ne.s32.totalorder %s302, %s303
      %p312 = scmp.eq.s32.totalorder %s35, 0
      %p313 = por %p311, %p312
      %p314 = scmp.ne.s32.totalorder %s302, %s303
      %p315 = scmp.eq.s32.totalorder %s36, 1
      %p316 = por %p314, %p315
      %p318 = scmp.ne.s32.totalorder %s303, %s317
      %p319 = scmp.eq.s32.totalorder %s36, 0
      %p320 = por %p318, %p319
      %s321 = ssub.s32 %s30, %s37
      %p322 = scmp.eq.s32.totalorder %s321, 0
      %s324 = sadd.s32 %s323, 1
      %s325 = scalar_select %p322, %s323, %s324
      %p328 = pneg %p322
      %p329 = scmp.eq.s32.totalorder %s30, 1
      %p330 = por %p328, %p329
      %p331 = scmp.ne.s32.totalorder %s323, %s326
      %p332 = scmp.eq.s32.totalorder %s30, 0
      %p333 = por %p331, %p332
      %p334 = scmp.ne.s32.totalorder %s323, %s326
      %p335 = scmp.eq.s32.totalorder %s35, 1
      %p336 = por %p334, %p335
      %p337 = scmp.ne.s32.totalorder %s326, %s327
      %p338 = scmp.eq.s32.totalorder %s35, 0
      %p339 = por %p337, %p338
      %p340 = scmp.ne.s32.totalorder %s326, %s327
      %p341 = scmp.eq.s32.totalorder %s36, 1
      %p342 = por %p340, %p341
      %p344 = scmp.ne.s32.totalorder %s327, %s343
      %p345 = scmp.eq.s32.totalorder %s36, 0
      %p346 = por %p344, %p345
      %p347 = scmp.le.s32.totalorder 1, %s30
      %p348 = scmp.lt.s32.totalorder %s30, 3
      %p349 = pnand %p347, %p348
      %p350 = pneg %p349
      // Predicated region
      $region9: #{tpu_custom_call.1} parent=5 // pred_check
        _
      $region10: #{tpu_custom_call.1} parent=5 // pred_check_branch
        %352 = sbr.rel (%p349) target = $region12
      $region11: #{tpu_custom_call.1} parent=5 // pred_region
        %s353 = ssub.s32 %s30, 1
        // Predicated region
        $region13: #{tpu_custom_call.1} parent=11 // pred_check
          %p354 = pneg %p51
        $region14: #{tpu_custom_call.1} parent=11 // pred_check_branch
          %356 = sbr.rel (%p354) target = $region16
        $region15: #{tpu_custom_call.1} parent=11 // pred_region
          %358 = vsyncadd [#allocation4], 0
          %s359 = sshll.u32 %s0, 4
          %s360 = int_to_ptr.hbm [resolvable:$true] %s359
          %s361 = sshll.u32 [#allocation3], 4
          %s362 = int_to_ptr.vmem [resolvable:$true] %s361
          %367 = dma.hbm_to_vmem [thread:$0]  %s360, 256, %s362, [#allocation4], 128, 128, 8
        $region16: #{tpu_custom_call.1} parent=11 // pred_fallthru
          _
        // Predicated region
        $region17: #{tpu_custom_call.1} parent=11 // pred_check
          %p368 = pneg %p124
        $region18: #{tpu_custom_call.1} parent=11 // pred_check_branch
          %370 = sbr.rel (%p368) target = $region20
        $region19: #{tpu_custom_call.1} parent=11 // pred_region
          %372 = vsyncadd [#allocation10], 0
          %s373 = sshll.u32 %s3, 4
          %s374 = int_to_ptr.hbm [resolvable:$true] %s373
          %s375 = sshll.u32 [#allocation9], 4
          %s376 = int_to_ptr.vmem [resolvable:$true] %s375
          %381 = dma.hbm_to_vmem [thread:$0]  %s374, 1024, %s376, [#allocation10], 64, 64, 4
        $region20: #{tpu_custom_call.1} parent=11 // pred_fallthru
          _
        // Predicated region
        $region21: #{tpu_custom_call.1} parent=11 // pred_check
          %p382 = pneg %p145
        $region22: #{tpu_custom_call.1} parent=11 // pred_check_branch
          %384 = sbr.rel (%p382) target = $region24
        $region23: #{tpu_custom_call.1} parent=11 // pred_region
          _
        $region24: #{tpu_custom_call.1} parent=11 // pred_fallthru
          _
        // Predicated region
        $region25: #{tpu_custom_call.1} parent=11 // pred_check
          %p385 = pneg %p166
        $region26: #{tpu_custom_call.1} parent=11 // pred_check_branch
          %387 = sbr.rel (%p385) target = $region28
        $region27: #{tpu_custom_call.1} parent=11 // pred_region
          %389 = vsyncadd [#allocation10], 0
          %s390 = sshll.u32 %s5, 4
          %s391 = int_to_ptr.hbm [resolvable:$true] %s390
          %s392 = sshll.u32 [#allocation11], 4
          %s393 = int_to_ptr.vmem [resolvable:$true] %s392
          %398 = dma.hbm_to_vmem [thread:$0]  %s391, 1024, %s393, [#allocation10], 64, 64, 4
        $region28: #{tpu_custom_call.1} parent=11 // pred_fallthru
          _
        // Predicated region
        $region29: #{tpu_custom_call.1} parent=11 // pred_check
          %p399 = pneg %p187
        $region30: #{tpu_custom_call.1} parent=11 // pred_check_branch
          %401 = sbr.rel (%p399) target = $region32
        $region31: #{tpu_custom_call.1} parent=11 // pred_region
          _
        $region32: #{tpu_custom_call.1} parent=11 // pred_fallthru
          _
        // Predicated region
        $region33: #{tpu_custom_call.1} parent=11 // pred_check
          %p402 = pneg %p208
        $region34: #{tpu_custom_call.1} parent=11 // pred_check_branch
          %404 = sbr.rel (%p402) target = $region36
        $region35: #{tpu_custom_call.1} parent=11 // pred_region
          _
        $region36: #{tpu_custom_call.1} parent=11 // pred_fallthru
          _
        // Predicated region
        $region37: #{tpu_custom_call.1} parent=11 // pred_check
          %p405 = pneg %p229
        $region38: #{tpu_custom_call.1} parent=11 // pred_check_branch
          %407 = sbr.rel (%p405) target = $region40
        $region39: #{tpu_custom_call.1} parent=11 // pred_region
          _
        $region40: #{tpu_custom_call.1} parent=11 // pred_fallthru
          _
        // Predicated region
        $region41: #{tpu_custom_call.1} parent=11 // pred_check
          %p408 = pneg %p250
        $region42: #{tpu_custom_call.1} parent=11 // pred_check_branch
          %410 = sbr.rel (%p408) target = $region44
        $region43: #{tpu_custom_call.1} parent=11 // pred_region
          %412 = vsyncadd [#allocation13], 0
          %s413 = sshll.u32 %s9, 4
          %s414 = int_to_ptr.hbm [resolvable:$true] %s413
          %s415 = sshll.u32 [#allocation12], 4
          %s416 = int_to_ptr.vmem [resolvable:$true] %s415
          %421 = dma.hbm_to_vmem [thread:$0]  %s414, 1024, %s416, [#allocation13], 64, 64, 4
        $region44: #{tpu_custom_call.1} parent=11 // pred_fallthru
          _
        // Predicated region
        $region45: #{tpu_custom_call.1} parent=11 // pred_check
          %p422 = pneg %p271
        $region46: #{tpu_custom_call.1} parent=11 // pred_check_branch
          %424 = sbr.rel (%p422) target = $region48
        $region47: #{tpu_custom_call.1} parent=11 // pred_region
          _
        $region48: #{tpu_custom_call.1} parent=11 // pred_fallthru
          _
        // Predicated region
        $region49: #{tpu_custom_call.1} parent=11 // pred_check
          %p425 = pneg %p292
        $region50: #{tpu_custom_call.1} parent=11 // pred_check_branch
          %427 = sbr.rel (%p425) target = $region52
        $region51: #{tpu_custom_call.1} parent=11 // pred_region
          %429 = vsyncadd [#allocation13], 0
          %s430 = sshll.u32 %s11, 4
          %s431 = int_to_ptr.hbm [resolvable:$true] %s430
          %s432 = sshll.u32 [#allocation14], 4
          %s433 = int_to_ptr.vmem [resolvable:$true] %s432
          %438 = dma.hbm_to_vmem [thread:$0]  %s431, 1024, %s433, [#allocation13], 64, 64, 4
        $region52: #{tpu_custom_call.1} parent=11 // pred_fallthru
          _
        // Predicated region
        $region53: #{tpu_custom_call.1} parent=11 // pred_check
          %p439 = pneg %p313
        $region54: #{tpu_custom_call.1} parent=11 // pred_check_branch
          %441 = sbr.rel (%p439) target = $region56
        $region55: #{tpu_custom_call.1} parent=11 // pred_region
          _
        $region56: #{tpu_custom_call.1} parent=11 // pred_fallthru
          _
      $region12: #{tpu_custom_call.1} parent=5 // pred_fallthru
        _
      %p442 = scmp.lt.s32.totalorder %s30, 2
      // Predicated region
      $region57: #{tpu_custom_call.1} parent=5 // pred_check
        %p443 = pneg %p442
      $region58: #{tpu_custom_call.1} parent=5 // pred_check_branch
        %445 = sbr.rel (%p443) target = $region60
      $region59: #{tpu_custom_call.1} parent=5 // pred_region
        // Predicated region
        $region61: #{tpu_custom_call.1} parent=59 // pred_check
          %p446 = pneg %p71
        $region62: #{tpu_custom_call.1} parent=59 // pred_check_branch
          %448 = sbr.rel (%p446) target = $region64
        $region63: #{tpu_custom_call.1} parent=59 // pred_region
          %s449 = sand.u32 %s30, 1
          %s450 = scalar_lea.sflag [#allocation7], %s449
          %s451 = sand.u32 %s61, 1
          %s452 = smul.addr %s451, 8
          %s453 = scalar_lea.vmem [#allocation6], %s452
          %455 = vsyncadd %s450, 0
          %s456 = smul.addr %s30, 8
          %s457 = scalar_lea.hbm %s1, %s456
          %s459 = sshll.u32 %s457, 4
          %s460 = int_to_ptr.hbm [resolvable:$true] %s459
          %s461 = sshll.u32 %s453, 4
          %s462 = int_to_ptr.vmem [resolvable:$true] %s461
          %464 = dma.hbm_to_vmem [thread:$0]  %s460, 128, %s462, %s450
        $region64: #{tpu_custom_call.1} parent=59 // pred_fallthru
          _
        // Predicated region
        $region65: #{tpu_custom_call.1} parent=59 // pred_check
          %p465 = pneg %p97
        $region66: #{tpu_custom_call.1} parent=59 // pred_check_branch
          %467 = sbr.rel (%p465) target = $region68
        $region67: #{tpu_custom_call.1} parent=59 // pred_region
          %s468 = sand.u32 %s30, 1
          %s469 = scalar_lea.sflag [#allocation7], %s468
          %s470 = sand.u32 %s87, 1
          %s471 = smul.addr %s470, 8
          %s472 = scalar_lea.vmem [#allocation8], %s471
          %474 = vsyncadd %s469, 0
          %s475 = smul.addr %s30, 8
          %s476 = scalar_lea.hbm %s2, %s475
          %s478 = sshll.u32 %s476, 4
          %s479 = int_to_ptr.hbm [resolvable:$true] %s478
          %s480 = sshll.u32 %s472, 4
          %s481 = int_to_ptr.vmem [resolvable:$true] %s480
          %483 = dma.hbm_to_vmem [thread:$0]  %s479, 128, %s481, %s469
        $region68: #{tpu_custom_call.1} parent=59 // pred_fallthru
          _
      $region60: #{tpu_custom_call.1} parent=5 // pred_fallthru
        _
      %p484 = scmp.le.s32.totalorder 1, %s30
      %p485 = scmp.lt.s32.totalorder %s30, 3
      %p486 = pnand %p484, %p485
      %p487 = pneg %p486
      // Predicated region
      $region69: #{tpu_custom_call.1} parent=5 // pred_check
        _
      $region70: #{tpu_custom_call.1} parent=5 // pred_check_branch
        %489 = sbr.rel (%p486) target = $region72
      $region71: #{tpu_custom_call.1} parent=5 // pred_region
        %s490 = ssub.s32 %s30, 1
        // Predicated region
        $region73: #{tpu_custom_call.1} parent=71 // pred_check
          %p491 = pneg %p51
        $region74: #{tpu_custom_call.1} parent=71 // pred_check_branch
          %493 = sbr.rel (%p491) target = $region76
        $region75: #{tpu_custom_call.1} parent=71 // pred_region
          %495 = dma.done [#allocation4], 256
        $region76: #{tpu_custom_call.1} parent=71 // pred_fallthru
          _
        %s496 = sand.u32 %s35, 1
        %s497 = scalar_lea.sflag [#allocation7], %s496
        %s498 = sand.u32 %s64, 1
        %s499 = smul.addr %s498, 8
        %s500 = scalar_lea.vmem [#allocation6], %s499
        // Predicated region
        $region77: #{tpu_custom_call.1} parent=71 // pred_check
          %p501 = pneg %p77
        $region78: #{tpu_custom_call.1} parent=71 // pred_check_branch
          %503 = sbr.rel (%p501) target = $region80
        $region79: #{tpu_custom_call.1} parent=71 // pred_region
          %505 = dma.done %s497, 128
        $region80: #{tpu_custom_call.1} parent=71 // pred_fallthru
          _
        %s506 = sand.u32 %s35, 1
        %s507 = scalar_lea.sflag [#allocation7], %s506
        %s508 = sand.u32 %s90, 1
        %s509 = smul.addr %s508, 8
        %s510 = scalar_lea.vmem [#allocation8], %s509
        // Predicated region
        $region81: #{tpu_custom_call.1} parent=71 // pred_check
          %p511 = pneg %p103
        $region82: #{tpu_custom_call.1} parent=71 // pred_check_branch
          %513 = sbr.rel (%p511) target = $region84
        $region83: #{tpu_custom_call.1} parent=71 // pred_region
          %515 = dma.done %s507, 128
        $region84: #{tpu_custom_call.1} parent=71 // pred_fallthru
          _
        // Predicated region
        $region85: #{tpu_custom_call.1} parent=71 // pred_check
          %p516 = pneg %p124
        $region86: #{tpu_custom_call.1} parent=71 // pred_check_branch
          %518 = sbr.rel (%p516) target = $region88
        $region87: #{tpu_custom_call.1} parent=71 // pred_region
          %520 = dma.done [#allocation10], 1024
        $region88: #{tpu_custom_call.1} parent=71 // pred_fallthru
          _
        // Predicated region
        $region89: #{tpu_custom_call.1} parent=71 // pred_check
          %p521 = pneg %p166
        $region90: #{tpu_custom_call.1} parent=71 // pred_check_branch
          %523 = sbr.rel (%p521) target = $region92
        $region91: #{tpu_custom_call.1} parent=71 // pred_region
          %525 = dma.done [#allocation10], 1024
        $region92: #{tpu_custom_call.1} parent=71 // pred_fallthru
          _
        // Predicated region
        $region93: #{tpu_custom_call.1} parent=71 // pred_check
          %p526 = pneg %p250
        $region94: #{tpu_custom_call.1} parent=71 // pred_check_branch
          %528 = sbr.rel (%p526) target = $region96
        $region95: #{tpu_custom_call.1} parent=71 // pred_region
          %530 = dma.done [#allocation13], 1024
        $region96: #{tpu_custom_call.1} parent=71 // pred_fallthru
          _
        // Predicated region
        $region97: #{tpu_custom_call.1} parent=71 // pred_check
          %p531 = pneg %p292
        $region98: #{tpu_custom_call.1} parent=71 // pred_check_branch
          %533 = sbr.rel (%p531) target = $region100
        $region99: #{tpu_custom_call.1} parent=71 // pred_region
          %535 = dma.done [#allocation13], 1024
        $region100: #{tpu_custom_call.1} parent=71 // pred_fallthru
          _
        %p536 = pneg %p51
        %p537 = pneg %p48
        %s538 = sand.u32 %s35, 1
        %s539 = scalar_lea.sflag [#allocation7], %s538
        %s540 = sand.u32 %s64, 1
        %s541 = smul.addr %s540, 8
        %s542 = scalar_lea.vmem [#allocation6], %s541
        %p543 = pneg %p77
        %p544 = pneg %p74
        %s545 = sand.u32 %s35, 1
        %s546 = scalar_lea.sflag [#allocation7], %s545
        %s547 = sand.u32 %s90, 1
        %s548 = smul.addr %s547, 8
        %s549 = scalar_lea.vmem [#allocation8], %s548
        %p550 = pneg %p103
        %p551 = pneg %p100
        %p552 = pneg %p124
        %p553 = pneg %p121
        %p554 = pneg %p145
        %p555 = pneg %p142
        %p556 = pneg %p166
        %p557 = pneg %p163
        %p558 = pneg %p187
        %p559 = pneg %p184
        %p560 = pneg %p208
        %p561 = pneg %p205
        %p562 = pneg %p229
        %p563 = pneg %p226
        %p564 = pneg %p250
        %p565 = pneg %p247
        %p566 = pneg %p271
        %p567 = pneg %p268
        %p568 = pneg %p292
        %p569 = pneg %p289
        %p570 = pneg %p313
        %p571 = pneg %p310
        %p572 = pneg %p339
        %p573 = pneg %p336
        %s574 = sand.u32 %s326, 1
        %s575 = scalar_lea.sflag [#allocation5], %s574
        %s576 = sand.u32 %s326, 1
        %s577 = smul.addr %s576, 8
        %s578 = scalar_lea.vmem [#allocation15], %s577
        %v579 = vld [vmem:[#allocation3] sm:$0xff]
        %v580 = vld [vmem:[#allocation3 + $0x8] sm:$0xff]
        %v581 = vpack.c.bf16 %v580, %v579
        %v582 = vld [vmem:[%s500] sm:$0xff]
        %v583 = vpack.c.bf16 %v582, %v582
        %v584 = vld [vmem:[%s510] sm:$0xff]
        %v585 = vpack.c.bf16 %v584, %v584
        %v586 = vld [vmem:[#allocation9] sm:$0xf]
        %v587 = vld [vmem:[#allocation9 + $0x4] sm:$0xf]
        %v588 = vld [vmem:[#allocation9 + $0x8] sm:$0xf]
        %v589 = vld [vmem:[#allocation9 + $0xc] sm:$0xf]
        %v590 = vld [vmem:[#allocation9 + $0x10] sm:$0xf]
        %v591 = vld [vmem:[#allocation9 + $0x14] sm:$0xf]
        %v592 = vld [vmem:[#allocation9 + $0x18] sm:$0xf]
        %v593 = vld [vmem:[#allocation9 + $0x1c] sm:$0xf]
        %v594 = vld [vmem:[#allocation9 + $0x20] sm:$0xf]
        %v595 = vld [vmem:[#allocation9 + $0x24] sm:$0xf]
        %v596 = vld [vmem:[#allocation9 + $0x28] sm:$0xf]
        %v597 = vld [vmem:[#allocation9 + $0x2c] sm:$0xf]
        %v598 = vld [vmem:[#allocation9 + $0x30] sm:$0xf]
        %v599 = vld [vmem:[#allocation9 + $0x34] sm:$0xf]
        %v600 = vld [vmem:[#allocation9 + $0x38] sm:$0xf]
        %v601 = vld [vmem:[#allocation9 + $0x3c] sm:$0xf]
        %v602 = vld [vmem:[%s4] sm:$0x1]
        %v604 = vperm.slane %v602, 0
        %v622 = vunpack.c.l.b16 %v586
        %v623 = vunpack.c.l.b16 %v587
        %v624 = vunpack.c.l.b16 %v588
        %v625 = vunpack.c.l.b16 %v589
        %v626 = vunpack.c.l.b16 %v590
        %v627 = vunpack.c.l.b16 %v591
        %v628 = vunpack.c.l.b16 %v592
        %v629 = vunpack.c.l.b16 %v593
        %v630 = vunpack.c.l.b16 %v594
        %v631 = vunpack.c.l.b16 %v595
        %v632 = vunpack.c.l.b16 %v596
        %v633 = vunpack.c.l.b16 %v597
        %v634 = vunpack.c.l.b16 %v598
        %v635 = vunpack.c.l.b16 %v599
        %v636 = vunpack.c.l.b16 %v600
        %v637 = vunpack.c.l.b16 %v601
        %v638 = vpack.c.b16 %v623, %v622
        %v639 = vpack.c.b16 %v625, %v624
        %v640 = vpack.c.b16 %v627, %v626
        %v641 = vpack.c.b16 %v629, %v628
        %v642 = vpack.c.b16 %v631, %v630
        %v643 = vpack.c.b16 %v633, %v632
        %v644 = vpack.c.b16 %v635, %v634
        %v645 = vpack.c.b16 %v637, %v636
        %654 = vmatpush.bf16.msra.mxu0 %v645
        %655 = vmatpush.bf16.msra.mxu0 %v644
        %656 = vmatpush.bf16.msra.mxu0 %v643
        %657 = vmatpush.bf16.msra.mxu0 %v642
        %658 = vmatpush.bf16.msra.mxu0 %v641
        %659 = vmatpush.bf16.msra.mxu0 %v640
        %660 = vmatpush.bf16.msra.mxu0 %v639
        %661 = vmatpush.bf16.msra.mxu0 %v638
        %662 = vmatmul.bf16.gmra.mxu0 %v581
        %v663 = vpop.f32.mrf.mxu0
        %v664 = vadd.f32 %v604, %v663
        %v665 = vpop.f32.mrf.mxu0
        %v666 = vadd.f32 %v604, %v665
        %667 = vdwg.mxu0
        %668 = vmatpush.bf16.msra.mxu0 %v645
        %669 = vmatpush.bf16.msra.mxu0 %v644
        %670 = vmatpush.bf16.msra.mxu0 %v643
        %671 = vmatpush.bf16.msra.mxu0 %v642
        %672 = vmatpush.bf16.msra.mxu0 %v641
        %673 = vmatpush.bf16.msra.mxu0 %v640
        %674 = vmatpush.bf16.msra.mxu0 %v639
        %675 = vmatpush.bf16.msra.mxu0 %v638
        %676 = vmatmul.bf16.gmra.mxu0 %v583
        %v677 = vpop.f32.mrf.mxu0
        %v678 = vadd.f32 %v604, %v677
        %v679 = vpop.f32.mrf.mxu0
        %680 = vdwg.mxu0
        %v681 = vld [vmem:[#allocation11] sm:$0xf]
        %v682 = vld [vmem:[#allocation11 + $0x4] sm:$0xf]
        %v683 = vld [vmem:[#allocation11 + $0x8] sm:$0xf]
        %v684 = vld [vmem:[#allocation11 + $0xc] sm:$0xf]
        %v685 = vld [vmem:[#allocation11 + $0x10] sm:$0xf]
        %v686 = vld [vmem:[#allocation11 + $0x14] sm:$0xf]
        %v687 = vld [vmem:[#allocation11 + $0x18] sm:$0xf]
        %v688 = vld [vmem:[#allocation11 + $0x1c] sm:$0xf]
        %v689 = vld [vmem:[#allocation11 + $0x20] sm:$0xf]
        %v690 = vld [vmem:[#allocation11 + $0x24] sm:$0xf]
        %v691 = vld [vmem:[#allocation11 + $0x28] sm:$0xf]
        %v692 = vld [vmem:[#allocation11 + $0x2c] sm:$0xf]
        %v693 = vld [vmem:[#allocation11 + $0x30] sm:$0xf]
        %v694 = vld [vmem:[#allocation11 + $0x34] sm:$0xf]
        %v695 = vld [vmem:[#allocation11 + $0x38] sm:$0xf]
        %v696 = vld [vmem:[#allocation11 + $0x3c] sm:$0xf]
        %v697 = vld [vmem:[%s6] sm:$0x1]
        %v699 = vperm.slane %v697, 0
        %v717 = vunpack.c.l.b16 %v681
        %v718 = vunpack.c.l.b16 %v682
        %v719 = vunpack.c.l.b16 %v683
        %v720 = vunpack.c.l.b16 %v684
        %v721 = vunpack.c.l.b16 %v685
        %v722 = vunpack.c.l.b16 %v686
        %v723 = vunpack.c.l.b16 %v687
        %v724 = vunpack.c.l.b16 %v688
        %v725 = vunpack.c.l.b16 %v689
        %v726 = vunpack.c.l.b16 %v690
        %v727 = vunpack.c.l.b16 %v691
        %v728 = vunpack.c.l.b16 %v692
        %v729 = vunpack.c.l.b16 %v693
        %v730 = vunpack.c.l.b16 %v694
        %v731 = vunpack.c.l.b16 %v695
        %v732 = vunpack.c.l.b16 %v696
        %v733 = vpack.c.b16 %v718, %v717
        %v734 = vpack.c.b16 %v720, %v719
        %v735 = vpack.c.b16 %v722, %v721
        %v736 = vpack.c.b16 %v724, %v723
        %v737 = vpack.c.b16 %v726, %v725
        %v738 = vpack.c.b16 %v728, %v727
        %v739 = vpack.c.b16 %v730, %v729
        %v740 = vpack.c.b16 %v732, %v731
        %749 = vmatpush.bf16.msra.mxu0 %v740
        %750 = vmatpush.bf16.msra.mxu0 %v739
        %751 = vmatpush.bf16.msra.mxu0 %v738
        %752 = vmatpush.bf16.msra.mxu0 %v737
        %753 = vmatpush.bf16.msra.mxu0 %v736
        %754 = vmatpush.bf16.msra.mxu0 %v735
        %755 = vmatpush.bf16.msra.mxu0 %v734
        %756 = vmatpush.bf16.msra.mxu0 %v733
        %757 = vmatmul.bf16.gmra.mxu0 %v585
        %v758 = vpop.f32.mrf.mxu0
        %v759 = vadd.f32 %v699, %v758
        %v760 = vpop.f32.mrf.mxu0
        %761 = vdwg.mxu0
        %v763 = vrot.slane %v759, 1
        %v764 = vrot.slane %v759, 2
        %v765 = vrot.slane %v759, 3
        %v766 = vrot.slane %v759, 4
        %v767 = vrot.slane %v759, 5
        %v768 = vrot.slane %v759, 6
        %v769 = vrot.slane %v759, 7
        %v770 = vperm.slane %v759, 0
        %v771 = vperm.slane %v763, 0
        %v772 = vperm.slane %v764, 0
        %v773 = vperm.slane %v765, 0
        %v774 = vperm.slane %v766, 0
        %v775 = vperm.slane %v767, 0
        %v776 = vperm.slane %v768, 0
        %v777 = vperm.slane %v769, 0
        %v786 = vadd.f32 %v664, %v770
        %v787 = vadd.f32 %v666, %v770
        %v788 = vadd.f32 %v664, %v771
        %v789 = vadd.f32 %v666, %v771
        %v790 = vadd.f32 %v664, %v772
        %v791 = vadd.f32 %v666, %v772
        %v792 = vadd.f32 %v664, %v773
        %v793 = vadd.f32 %v666, %v773
        %v794 = vadd.f32 %v664, %v774
        %v795 = vadd.f32 %v666, %v774
        %v796 = vadd.f32 %v664, %v775
        %v797 = vadd.f32 %v666, %v775
        %v798 = vadd.f32 %v664, %v776
        %v799 = vadd.f32 %v666, %v776
        %v800 = vadd.f32 %v664, %v777
        %v801 = vadd.f32 %v666, %v777
        %v802 = vtanh.pop %v786
        %v803 = vtanh.pop %v787
        %v804 = vtanh.pop %v788
        %v805 = vtanh.pop %v789
        %v806 = vtanh.pop %v790
        %v807 = vtanh.pop %v791
        %v808 = vtanh.pop %v792
        %v809 = vtanh.pop %v793
        %v810 = vtanh.pop %v794
        %v811 = vtanh.pop %v795
        %v812 = vtanh.pop %v796
        %v813 = vtanh.pop %v797
        %v814 = vtanh.pop %v798
        %v815 = vtanh.pop %v799
        %v816 = vtanh.pop %v800
        %v817 = vtanh.pop %v801
        %v818 = vld [vmem:[%s7] sm:$0x1]
        %v820 = vperm.slane %v818, 0
        %v822 = vmul.f32 %v802, %v820
        %v823 = vmul.f32 %v803, %v820
        %v824 = vmul.f32 %v804, %v820
        %v825 = vmul.f32 %v805, %v820
        %v826 = vmul.f32 %v806, %v820
        %v827 = vmul.f32 %v807, %v820
        %v828 = vmul.f32 %v808, %v820
        %v829 = vmul.f32 %v809, %v820
        %v830 = vmul.f32 %v810, %v820
        %v831 = vmul.f32 %v811, %v820
        %v832 = vmul.f32 %v812, %v820
        %v833 = vmul.f32 %v813, %v820
        %v834 = vmul.f32 %v814, %v820
        %v835 = vmul.f32 %v815, %v820
        %v836 = vmul.f32 %v816, %v820
        %v837 = vmul.f32 %v817, %v820
        %838 = vadd.xlane.f32.xlu0 %v822
        %v839 = vpop.xlane.xlu0 %838
        %840 = vadd.xlane.f32.xlu0 %v823
        %v841 = vpop.xlane.xlu0 %840
        %842 = vadd.xlane.f32.xlu0 %v824
        %v843 = vpop.xlane.xlu0 %842
        %844 = vadd.xlane.f32.xlu0 %v825
        %v845 = vpop.xlane.xlu0 %844
        %846 = vadd.xlane.f32.xlu0 %v826
        %v847 = vpop.xlane.xlu0 %846
        %848 = vadd.xlane.f32.xlu0 %v827
        %v849 = vpop.xlane.xlu0 %848
        %850 = vadd.xlane.f32.xlu0 %v828
        %v851 = vpop.xlane.xlu0 %850
        %852 = vadd.xlane.f32.xlu0 %v829
        %v853 = vpop.xlane.xlu0 %852
        %854 = vadd.xlane.f32.xlu0 %v830
        %v855 = vpop.xlane.xlu0 %854
        %856 = vadd.xlane.f32.xlu0 %v831
        %v857 = vpop.xlane.xlu0 %856
        %858 = vadd.xlane.f32.xlu0 %v832
        %v859 = vpop.xlane.xlu0 %858
        %860 = vadd.xlane.f32.xlu0 %v833
        %v861 = vpop.xlane.xlu0 %860
        %862 = vadd.xlane.f32.xlu0 %v834
        %v863 = vpop.xlane.xlu0 %862
        %864 = vadd.xlane.f32.xlu0 %v835
        %v865 = vpop.xlane.xlu0 %864
        %866 = vadd.xlane.f32.xlu0 %v836
        %v867 = vpop.xlane.xlu0 %866
        %868 = vadd.xlane.f32.xlu0 %v837
        %v869 = vpop.xlane.xlu0 %868
        %v870 = vld [vmem:[#allocation2] sm:$0x1]
        %v872 = vperm.slane %v870, 0
        %873 = vset.pattern.permute.xlu0 0
        %874 = vperm.xlu0 %873, %v872
        %v875 = vpop.permute.xlu0 %874
        %v877 = vadd.f32 %v839, %v875
        %v878 = vadd.f32 %v841, %v875
        %v879 = vadd.f32 %v843, %v875
        %v880 = vadd.f32 %v845, %v875
        %v881 = vadd.f32 %v847, %v875
        %v882 = vadd.f32 %v849, %v875
        %v883 = vadd.f32 %v851, %v875
        %v884 = vadd.f32 %v853, %v875
        %v885 = vadd.f32 %v855, %v875
        %v886 = vadd.f32 %v857, %v875
        %v887 = vadd.f32 %v859, %v875
        %v888 = vadd.f32 %v861, %v875
        %v889 = vadd.f32 %v863, %v875
        %v890 = vadd.f32 %v865, %v875
        %v891 = vadd.f32 %v867, %v875
        %v892 = vadd.f32 %v869, %v875
        %v909 = vlaneseq
        %v910 = vand.u32 %v909, 127
        %v911 = vperm.slane %v877, %v910
        %v912 = vadd.s32 %v910, 4294967288
        %v913 = vperm.slane %v878, %v912
        %vm914 = vcmask 130112
        %v915 = vsel %vm914, %v913, %v911
        %v916 = vperm.slane %v879, %v910
        %v917 = vperm.slane %v880, %v912
        %v918 = vsel %vm914, %v917, %v916
        %v919 = vperm.slane %v881, %v910
        %v920 = vperm.slane %v882, %v912
        %v921 = vsel %vm914, %v920, %v919
        %v922 = vperm.slane %v883, %v910
        %v923 = vperm.slane %v884, %v912
        %v924 = vsel %vm914, %v923, %v922
        %v925 = vperm.slane %v885, %v910
        %v926 = vperm.slane %v886, %v912
        %v927 = vsel %vm914, %v926, %v925
        %v928 = vperm.slane %v887, %v910
        %v929 = vperm.slane %v888, %v912
        %v930 = vsel %vm914, %v929, %v928
        %v931 = vperm.slane %v889, %v910
        %v932 = vperm.slane %v890, %v912
        %v933 = vsel %vm914, %v932, %v931
        %v934 = vperm.slane %v891, %v910
        %v935 = vperm.slane %v892, %v912
        %v936 = vsel %vm914, %v935, %v934
        %vm937 = vcmask 1041409
        %v938 = vsel %vm937, %v918, %v915
        %vm939 = vcmask 1042434
        %v940 = vsel %vm939, %v921, %v938
        %vm941 = vcmask 1043459
        %v942 = vsel %vm941, %v924, %v940
        %vm943 = vcmask 1044484
        %v944 = vsel %vm943, %v927, %v942
        %vm945 = vcmask 1045509
        %v946 = vsel %vm945, %v930, %v944
        %vm947 = vcmask 1046534
        %v948 = vsel %vm947, %v933, %v946
        %vm949 = vcmask 1047559
        %v950 = vsel %vm949, %v936, %v948
        %vm952 = vcmask 130048
        %v953 = vsel %vm952, %v950, -inf
        %954 = vmax.xlane.f32.xlu0 %v953
        %v955 = vpop.xlane.xlu0 %954
        %v957 = vperm.slane %v955, 0
        %v958 = vperm.slane %v955, 1
        %v959 = vperm.slane %v955, 2
        %v960 = vperm.slane %v955, 3
        %v961 = vperm.slane %v955, 4
        %v962 = vperm.slane %v955, 5
        %v963 = vperm.slane %v955, 6
        %v964 = vperm.slane %v955, 7
        %v973 = vsub.f32 %v877, %v957
        %v974 = vsub.f32 %v878, %v957
        %v975 = vsub.f32 %v879, %v958
        %v976 = vsub.f32 %v880, %v958
        %v977 = vsub.f32 %v881, %v959
        %v978 = vsub.f32 %v882, %v959
        %v979 = vsub.f32 %v883, %v960
        %v980 = vsub.f32 %v884, %v960
        %v981 = vsub.f32 %v885, %v961
        %v982 = vsub.f32 %v886, %v961
        %v983 = vsub.f32 %v887, %v962
        %v984 = vsub.f32 %v888, %v962
        %v985 = vsub.f32 %v889, %v963
        %v986 = vsub.f32 %v890, %v963
        %v987 = vsub.f32 %v891, %v964
        %v988 = vsub.f32 %v892, %v964
        %v989 = vmul.f32 %v973, 1.442695
        %v990 = vpow.pop %v989
        %v991 = vmul.f32 %v974, 1.442695
        %v992 = vpow.pop %v991
        %v993 = vmul.f32 %v975, 1.442695
        %v994 = vpow.pop %v993
        %v995 = vmul.f32 %v976, 1.442695
        %v996 = vpow.pop %v995
        %v997 = vmul.f32 %v977, 1.442695
        %v998 = vpow.pop %v997
        %v999 = vmul.f32 %v978, 1.442695
        %v1000 = vpow.pop %v999
        %v1001 = vmul.f32 %v979, 1.442695
        %v1002 = vpow.pop %v1001
        %v1003 = vmul.f32 %v980, 1.442695
        %v1004 = vpow.pop %v1003
        %v1005 = vmul.f32 %v981, 1.442695
        %v1006 = vpow.pop %v1005
        %v1007 = vmul.f32 %v982, 1.442695
        %v1008 = vpow.pop %v1007
        %v1009 = vmul.f32 %v983, 1.442695
        %v1010 = vpow.pop %v1009
        %v1011 = vmul.f32 %v984, 1.442695
        %v1012 = vpow.pop %v1011
        %v1013 = vmul.f32 %v985, 1.442695
        %v1014 = vpow.pop %v1013
        %v1015 = vmul.f32 %v986, 1.442695
        %v1016 = vpow.pop %v1015
        %v1017 = vmul.f32 %v987, 1.442695
        %v1018 = vpow.pop %v1017
        %v1019 = vmul.f32 %v988, 1.442695
        %v1020 = vpow.pop %v1019
        %1037 = vset.pattern.permute.xlu0 0
        %1038 = vperm.xlu0 %1037, %v990
        %v1039 = vpop.permute.xlu0 %1038
        %1040 = vset.pattern.permute.xlu0 0
        %1041 = vperm.xlu0 %1040, %v992
        %v1042 = vpop.permute.xlu0 %1041
        %1043 = vset.pattern.permute.xlu0 0
        %1044 = vperm.xlu0 %1043, %v994
        %v1045 = vpop.permute.xlu0 %1044
        %1046 = vset.pattern.permute.xlu0 0
        %1047 = vperm.xlu0 %1046, %v996
        %v1048 = vpop.permute.xlu0 %1047
        %1049 = vset.pattern.permute.xlu0 0
        %1050 = vperm.xlu0 %1049, %v998
        %v1051 = vpop.permute.xlu0 %1050
        %1052 = vset.pattern.permute.xlu0 0
        %1053 = vperm.xlu0 %1052, %v1000
        %v1054 = vpop.permute.xlu0 %1053
        %1055 = vset.pattern.permute.xlu0 0
        %1056 = vperm.xlu0 %1055, %v1002
        %v1057 = vpop.permute.xlu0 %1056
        %1058 = vset.pattern.permute.xlu0 0
        %1059 = vperm.xlu0 %1058, %v1004
        %v1060 = vpop.permute.xlu0 %1059
        %1061 = vset.pattern.permute.xlu0 0
        %1062 = vperm.xlu0 %1061, %v1006
        %v1063 = vpop.permute.xlu0 %1062
        %1064 = vset.pattern.permute.xlu0 0
        %1065 = vperm.xlu0 %1064, %v1008
        %v1066 = vpop.permute.xlu0 %1065
        %1067 = vset.pattern.permute.xlu0 0
        %1068 = vperm.xlu0 %1067, %v1010
        %v1069 = vpop.permute.xlu0 %1068
        %1070 = vset.pattern.permute.xlu0 0
        %1071 = vperm.xlu0 %1070, %v1012
        %v1072 = vpop.permute.xlu0 %1071
        %1073 = vset.pattern.permute.xlu0 0
        %1074 = vperm.xlu0 %1073, %v1014
        %v1075 = vpop.permute.xlu0 %1074
        %1076 = vset.pattern.permute.xlu0 0
        %1077 = vperm.xlu0 %1076, %v1016
        %v1078 = vpop.permute.xlu0 %1077
        %1079 = vset.pattern.permute.xlu0 0
        %1080 = vperm.xlu0 %1079, %v1018
        %v1081 = vpop.permute.xlu0 %1080
        %1082 = vset.pattern.permute.xlu0 0
        %1083 = vperm.xlu0 %1082, %v1020
        %v1084 = vpop.permute.xlu0 %1083
        %v1085 = vperm.slane %v1039, %v910
        %v1086 = vperm.slane %v1042, %v912
        %v1087 = vsel %vm914, %v1086, %v1085
        %v1088 = vperm.slane %v1045, %v910
        %v1089 = vperm.slane %v1048, %v912
        %v1090 = vsel %vm914, %v1089, %v1088
        %v1091 = vperm.slane %v1051, %v910
        %v1092 = vperm.slane %v1054, %v912
        %v1093 = vsel %vm914, %v1092, %v1091
        %v1094 = vperm.slane %v1057, %v910
        %v1095 = vperm.slane %v1060, %v912
        %v1096 = vsel %vm914, %v1095, %v1094
        %v1097 = vperm.slane %v1063, %v910
        %v1098 = vperm.slane %v1066, %v912
        %v1099 = vsel %vm914, %v1098, %v1097
        %v1100 = vperm.slane %v1069, %v910
        %v1101 = vperm.slane %v1072, %v912
        %v1102 = vsel %vm914, %v1101, %v1100
        %v1103 = vperm.slane %v1075, %v910
        %v1104 = vperm.slane %v1078, %v912
        %v1105 = vsel %vm914, %v1104, %v1103
        %v1106 = vperm.slane %v1081, %v910
        %v1107 = vperm.slane %v1084, %v912
        %v1108 = vsel %vm914, %v1107, %v1106
        %v1109 = vsel %vm937, %v1090, %v1087
        %v1110 = vsel %vm939, %v1093, %v1109
        %v1111 = vsel %vm941, %v1096, %v1110
        %v1112 = vsel %vm943, %v1099, %v1111
        %v1113 = vsel %vm945, %v1102, %v1112
        %v1114 = vsel %vm947, %v1105, %v1113
        %v1115 = vsel %vm949, %v1108, %v1114
        %v1117 = vsel %vm952, %v1115, 0.0
        %1118 = vadd.xlane.f32.xlu0 %v1117
        %v1119 = vpop.xlane.xlu0 %1118
        %v1120 = vrcp.pop %v1119
        %v1122 = vperm.slane %v1120, 0
        %v1123 = vperm.slane %v1120, 1
        %v1124 = vperm.slane %v1120, 2
        %v1125 = vperm.slane %v1120, 3
        %v1126 = vperm.slane %v1120, 4
        %v1127 = vperm.slane %v1120, 5
        %v1128 = vperm.slane %v1120, 6
        %v1129 = vperm.slane %v1120, 7
        %v1138 = vmul.f32 %v990, %v1122
        %v1139 = vmul.f32 %v992, %v1122
        %v1140 = vmul.f32 %v994, %v1123
        %v1141 = vmul.f32 %v996, %v1123
        %v1142 = vmul.f32 %v998, %v1124
        %v1143 = vmul.f32 %v1000, %v1124
        %v1144 = vmul.f32 %v1002, %v1125
        %v1145 = vmul.f32 %v1004, %v1125
        %v1146 = vmul.f32 %v1006, %v1126
        %v1147 = vmul.f32 %v1008, %v1126
        %v1148 = vmul.f32 %v1010, %v1127
        %v1149 = vmul.f32 %v1012, %v1127
        %v1150 = vmul.f32 %v1014, %v1128
        %v1151 = vmul.f32 %v1016, %v1128
        %v1152 = vmul.f32 %v1018, %v1129
        %v1153 = vmul.f32 %v1020, %v1129
        %1170 = vset.pattern.permute.xlu0 0
        %1171 = vperm.xlu0 %1170, %v1138
        %v1172 = vpop.permute.xlu0 %1171
        %1173 = vset.pattern.permute.xlu0 0
        %1174 = vperm.xlu0 %1173, %v1139
        %v1175 = vpop.permute.xlu0 %1174
        %1176 = vset.pattern.permute.xlu0 0
        %1177 = vperm.xlu0 %1176, %v1140
        %v1178 = vpop.permute.xlu0 %1177
        %1179 = vset.pattern.permute.xlu0 0
        %1180 = vperm.xlu0 %1179, %v1141
        %v1181 = vpop.permute.xlu0 %1180
        %1182 = vset.pattern.permute.xlu0 0
        %1183 = vperm.xlu0 %1182, %v1142
        %v1184 = vpop.permute.xlu0 %1183
        %1185 = vset.pattern.permute.xlu0 0
        %1186 = vperm.xlu0 %1185, %v1143
        %v1187 = vpop.permute.xlu0 %1186
        %1188 = vset.pattern.permute.xlu0 0
        %1189 = vperm.xlu0 %1188, %v1144
        %v1190 = vpop.permute.xlu0 %1189
        %1191 = vset.pattern.permute.xlu0 0
        %1192 = vperm.xlu0 %1191, %v1145
        %v1193 = vpop.permute.xlu0 %1192
        %1194 = vset.pattern.permute.xlu0 0
        %1195 = vperm.xlu0 %1194, %v1146
        %v1196 = vpop.permute.xlu0 %1195
        %1197 = vset.pattern.permute.xlu0 0
        %1198 = vperm.xlu0 %1197, %v1147
        %v1199 = vpop.permute.xlu0 %1198
        %1200 = vset.pattern.permute.xlu0 0
        %1201 = vperm.xlu0 %1200, %v1148
        %v1202 = vpop.permute.xlu0 %1201
        %1203 = vset.pattern.permute.xlu0 0
        %1204 = vperm.xlu0 %1203, %v1149
        %v1205 = vpop.permute.xlu0 %1204
        %1206 = vset.pattern.permute.xlu0 0
        %1207 = vperm.xlu0 %1206, %v1150
        %v1208 = vpop.permute.xlu0 %1207
        %1209 = vset.pattern.permute.xlu0 0
        %1210 = vperm.xlu0 %1209, %v1151
        %v1211 = vpop.permute.xlu0 %1210
        %1212 = vset.pattern.permute.xlu0 0
        %1213 = vperm.xlu0 %1212, %v1152
        %v1214 = vpop.permute.xlu0 %1213
        %1215 = vset.pattern.permute.xlu0 0
        %1216 = vperm.xlu0 %1215, %v1153
        %v1217 = vpop.permute.xlu0 %1216
        %v1218 = vperm.slane %v1172, %v910
        %v1219 = vperm.slane %v1175, %v912
        %v1220 = vsel %vm914, %v1219, %v1218
        %v1221 = vperm.slane %v1178, %v910
        %v1222 = vperm.slane %v1181, %v912
        %v1223 = vsel %vm914, %v1222, %v1221
        %v1224 = vperm.slane %v1184, %v910
        %v1225 = vperm.slane %v1187, %v912
        %v1226 = vsel %vm914, %v1225, %v1224
        %v1227 = vperm.slane %v1190, %v910
        %v1228 = vperm.slane %v1193, %v912
        %v1229 = vsel %vm914, %v1228, %v1227
        %v1230 = vperm.slane %v1196, %v910
        %v1231 = vperm.slane %v1199, %v912
        %v1232 = vsel %vm914, %v1231, %v1230
        %v1233 = vperm.slane %v1202, %v910
        %v1234 = vperm.slane %v1205, %v912
        %v1235 = vsel %vm914, %v1234, %v1233
        %v1236 = vperm.slane %v1208, %v910
        %v1237 = vperm.slane %v1211, %v912
        %v1238 = vsel %vm914, %v1237, %v1236
        %v1239 = vperm.slane %v1214, %v910
        %v1240 = vperm.slane %v1217, %v912
        %v1241 = vsel %vm914, %v1240, %v1239
        %v1242 = vsel %vm937, %v1223, %v1220
        %v1243 = vsel %vm939, %v1226, %v1242
        %v1244 = vsel %vm941, %v1229, %v1243
        %v1245 = vsel %vm943, %v1232, %v1244
        %v1246 = vsel %vm945, %v1235, %v1245
        %v1247 = vsel %vm947, %v1238, %v1246
        %v1248 = vsel %vm949, %v1241, %v1247
        %v1250 = vsel %vm952, %v1248, 0.0
        %1251 = vadd.xlane.f32.xlu0 %v1250
        %v1252 = vpop.xlane.xlu0 %1251
        %v1253 = vmul.f32 %v678, %v1252
        %v1254 = vadd.f32 %v1253, %v759
        %v1255 = vpack.c.bf16 %v1254, %v1254
        %v1256 = vld [vmem:[#allocation12] sm:$0xf]
        %v1257 = vld [vmem:[#allocation12 + $0x4] sm:$0xf]
        %v1258 = vld [vmem:[#allocation12 + $0x8] sm:$0xf]
        %v1259 = vld [vmem:[#allocation12 + $0xc] sm:$0xf]
        %v1260 = vld [vmem:[#allocation12 + $0x10] sm:$0xf]
        %v1261 = vld [vmem:[#allocation12 + $0x14] sm:$0xf]
        %v1262 = vld [vmem:[#allocation12 + $0x18] sm:$0xf]
        %v1263 = vld [vmem:[#allocation12 + $0x1c] sm:$0xf]
        %v1264 = vld [vmem:[#allocation12 + $0x20] sm:$0xf]
        %v1265 = vld [vmem:[#allocation12 + $0x24] sm:$0xf]
        %v1266 = vld [vmem:[#allocation12 + $0x28] sm:$0xf]
        %v1267 = vld [vmem:[#allocation12 + $0x2c] sm:$0xf]
        %v1268 = vld [vmem:[#allocation12 + $0x30] sm:$0xf]
        %v1269 = vld [vmem:[#allocation12 + $0x34] sm:$0xf]
        %v1270 = vld [vmem:[#allocation12 + $0x38] sm:$0xf]
        %v1271 = vld [vmem:[#allocation12 + $0x3c] sm:$0xf]
        %v1272 = vld [vmem:[%s10] sm:$0x1]
        %v1274 = vperm.slane %v1272, 0
        %v1292 = vunpack.c.l.b16 %v1256
        %v1293 = vunpack.c.l.b16 %v1257
        %v1294 = vunpack.c.l.b16 %v1258
        %v1295 = vunpack.c.l.b16 %v1259
        %v1296 = vunpack.c.l.b16 %v1260
        %v1297 = vunpack.c.l.b16 %v1261
        %v1298 = vunpack.c.l.b16 %v1262
        %v1299 = vunpack.c.l.b16 %v1263
        %v1300 = vunpack.c.l.b16 %v1264
        %v1301 = vunpack.c.l.b16 %v1265
        %v1302 = vunpack.c.l.b16 %v1266
        %v1303 = vunpack.c.l.b16 %v1267
        %v1304 = vunpack.c.l.b16 %v1268
        %v1305 = vunpack.c.l.b16 %v1269
        %v1306 = vunpack.c.l.b16 %v1270
        %v1307 = vunpack.c.l.b16 %v1271
        %v1308 = vpack.c.b16 %v1293, %v1292
        %v1309 = vpack.c.b16 %v1295, %v1294
        %v1310 = vpack.c.b16 %v1297, %v1296
        %v1311 = vpack.c.b16 %v1299, %v1298
        %v1312 = vpack.c.b16 %v1301, %v1300
        %v1313 = vpack.c.b16 %v1303, %v1302
        %v1314 = vpack.c.b16 %v1305, %v1304
        %v1315 = vpack.c.b16 %v1307, %v1306
        %1324 = vmatpush.bf16.msra.mxu0 %v1315
        %1325 = vmatpush.bf16.msra.mxu0 %v1314
        %1326 = vmatpush.bf16.msra.mxu0 %v1313
        %1327 = vmatpush.bf16.msra.mxu0 %v1312
        %1328 = vmatpush.bf16.msra.mxu0 %v1311
        %1329 = vmatpush.bf16.msra.mxu0 %v1310
        %1330 = vmatpush.bf16.msra.mxu0 %v1309
        %1331 = vmatpush.bf16.msra.mxu0 %v1308
        %1332 = vmatmul.bf16.gmra.mxu0 %v1255
        %v1333 = vpop.f32.mrf.mxu0
        %v1334 = vadd.f32 %v1274, %v1333
        %v1335 = vpop.f32.mrf.mxu0
        %1336 = vdwg.mxu0
        %v1337 = vmax.f32 %v1334, 0.0
        %v1338 = vpack.c.bf16 %v1337, %v1337
        %v1339 = vld [vmem:[#allocation14] sm:$0xf]
        %v1340 = vld [vmem:[#allocation14 + $0x4] sm:$0xf]
        %v1341 = vld [vmem:[#allocation14 + $0x8] sm:$0xf]
        %v1342 = vld [vmem:[#allocation14 + $0xc] sm:$0xf]
        %v1343 = vld [vmem:[#allocation14 + $0x10] sm:$0xf]
        %v1344 = vld [vmem:[#allocation14 + $0x14] sm:$0xf]
        %v1345 = vld [vmem:[#allocation14 + $0x18] sm:$0xf]
        %v1346 = vld [vmem:[#allocation14 + $0x1c] sm:$0xf]
        %v1347 = vld [vmem:[#allocation14 + $0x20] sm:$0xf]
        %v1348 = vld [vmem:[#allocation14 + $0x24] sm:$0xf]
        %v1349 = vld [vmem:[#allocation14 + $0x28] sm:$0xf]
        %v1350 = vld [vmem:[#allocation14 + $0x2c] sm:$0xf]
        %v1351 = vld [vmem:[#allocation14 + $0x30] sm:$0xf]
        %v1352 = vld [vmem:[#allocation14 + $0x34] sm:$0xf]
        %v1353 = vld [vmem:[#allocation14 + $0x38] sm:$0xf]
        %v1354 = vld [vmem:[#allocation14 + $0x3c] sm:$0xf]
        %v1355 = vld [vmem:[%s12] sm:$0x1]
        %v1357 = vperm.slane %v1355, 0
        %v1375 = vunpack.c.l.b16 %v1339
        %v1376 = vunpack.c.l.b16 %v1340
        %v1377 = vunpack.c.l.b16 %v1341
        %v1378 = vunpack.c.l.b16 %v1342
        %v1379 = vunpack.c.l.b16 %v1343
        %v1380 = vunpack.c.l.b16 %v1344
        %v1381 = vunpack.c.l.b16 %v1345
        %v1382 = vunpack.c.l.b16 %v1346
        %v1383 = vunpack.c.l.b16 %v1347
        %v1384 = vunpack.c.l.b16 %v1348
        %v1385 = vunpack.c.l.b16 %v1349
        %v1386 = vunpack.c.l.b16 %v1350
        %v1387 = vunpack.c.l.b16 %v1351
        %v1388 = vunpack.c.l.b16 %v1352
        %v1389 = vunpack.c.l.b16 %v1353
        %v1390 = vunpack.c.l.b16 %v1354
        %v1391 = vpack.c.b16 %v1376, %v1375
        %v1392 = vpack.c.b16 %v1378, %v1377
        %v1393 = vpack.c.b16 %v1380, %v1379
        %v1394 = vpack.c.b16 %v1382, %v1381
        %v1395 = vpack.c.b16 %v1384, %v1383
        %v1396 = vpack.c.b16 %v1386, %v1385
        %v1397 = vpack.c.b16 %v1388, %v1387
        %v1398 = vpack.c.b16 %v1390, %v1389
        %1407 = vmatpush.bf16.msra.mxu0 %v1398
        %1408 = vmatpush.bf16.msra.mxu0 %v1397
        %1409 = vmatpush.bf16.msra.mxu0 %v1396
        %1410 = vmatpush.bf16.msra.mxu0 %v1395
        %1411 = vmatpush.bf16.msra.mxu0 %v1394
        %1412 = vmatpush.bf16.msra.mxu0 %v1393
        %1413 = vmatpush.bf16.msra.mxu0 %v1392
        %1414 = vmatpush.bf16.msra.mxu0 %v1391
        %1415 = vmatmul.bf16.gmra.mxu0 %v1338
        %v1416 = vpop.f32.mrf.mxu0
        %v1417 = vadd.f32 %v1357, %v1416
        %v1418 = vpop.f32.mrf.mxu0
        %1419 = vdwg.mxu0
        %1420 = vst [vmem:[%s578] sm:$0xff] %v1417
        %s1421 = sand.u32 %s326, 1
        %s1422 = scalar_lea.sflag [#allocation5], %s1421
        %s1423 = sand.u32 %s326, 1
        %s1424 = smul.addr %s1423, 8
        %s1425 = scalar_lea.vmem [#allocation15], %s1424
        // Predicated region
        $region101: #{tpu_custom_call.1} parent=71 // pred_check
          %p1426 = pneg %p336
        $region102: #{tpu_custom_call.1} parent=71 // pred_check_branch
          %1428 = sbr.rel (%p1426) target = $region104
        $region103: #{tpu_custom_call.1} parent=71 // pred_region
          %1430 = vsyncadd %s1422, 0
          %s1431 = smul.addr %s35, 8
          %s1432 = scalar_lea.hbm %s13, %s1431
          %s1434 = sshll.u32 %s1425, 4
          %s1435 = int_to_ptr.vmem [resolvable:$true] %s1434
          %s1436 = sshll.u32 %s1432, 4
          %s1437 = int_to_ptr.hbm [resolvable:$true] %s1436
          %1439 = dma.vmem_to_hbm [thread:$0]  %s1435, 128, %s1437, %s1422
        $region104: #{tpu_custom_call.1} parent=71 // pred_fallthru
          _
      $region72: #{tpu_custom_call.1} parent=5 // pred_fallthru
        _
      %p1440 = scmp.le.s32.totalorder 2, %s30
      // Predicated region
      $region105: #{tpu_custom_call.1} parent=5 // pred_check
        %p1441 = pneg %p1440
      $region106: #{tpu_custom_call.1} parent=5 // pred_check_branch
        %1443 = sbr.rel (%p1441) target = $region108
      $region107: #{tpu_custom_call.1} parent=5 // pred_region
        %s1444 = ssub.s32 %s30, 2
        // Predicated region
        $region109: #{tpu_custom_call.1} parent=107 // pred_check
          %p1445 = pneg %p342
        $region110: #{tpu_custom_call.1} parent=107 // pred_check_branch
          %1447 = sbr.rel (%p1445) target = $region112
        $region111: #{tpu_custom_call.1} parent=107 // pred_region
          %s1448 = sand.u32 %s327, 1
          %s1449 = scalar_lea.sflag [#allocation5], %s1448
          %s1450 = sand.u32 %s327, 1
          %s1451 = smul.addr %s1450, 8
          %s1452 = scalar_lea.vmem [#allocation15], %s1451
          %1454 = dma.done %s1449, 128
        $region112: #{tpu_custom_call.1} parent=107 // pred_fallthru
          _
      $region108: #{tpu_custom_call.1} parent=5 // pred_fallthru
        _
    $region6: #{tpu_custom_call.1} parent=1 // loop_footer
      %s34 = sadd.s32 1, %s30
    $region7: #{tpu_custom_call.1} parent=1 // loop_footer_branch
      %29 = sbr.rel target = $region3
    $region8: #{tpu_custom_call.1} parent=1 // loop_exit
      _
    %1455 = vsyncpa [#allocation4], 1
    %s1456 = scalar_lea.sflag [#allocation4], 1
    %1457 = vsyncpa %s1456, 1
    %1458 = vsyncpa [#allocation7], 1
    %s1459 = scalar_lea.sflag [#allocation7], 1
    %1460 = vsyncpa %s1459, 1
    %1461 = vsyncpa [#allocation10], 1
    %1462 = vsyncpa [#allocation13], 1
    %1463 = vsyncpa [#allocation5], 1
    %s1464 = scalar_lea.sflag [#allocation5], 1
    %1465 = vsyncpa %s1464, 1

</llo_original>
